<compile_context>
chip_gen: v7x
topology: tpu7x:2x2x1
jax: 0.10.0
libtpu: 0.0.40
codegen_flags: <defaults>
</compile_context>

<pallas_src>
import functools

import numpy as np
import jax
import jax.numpy as jnp
from jax.experimental import pallas as pl
from jax.experimental.pallas import tpu as pltpu


CP = 128        # padded channel width = one full lane group (lane-dense everywhere)
PAD_ROWS = 8    # zero halo rows on each side of the length axis in the halo scratch


# ---------------------------------------------------------------------------
# Fused whole-network Pallas kernel
# ---------------------------------------------------------------------------
def _densenet_kernel(x_ref, scales_ref, shifts_ref, weights_ref, cls_b_ref,
                     o_ref, h_ref, hp_ref, *, program):
    """One grid step = the whole DenseNet forward for one batch element.

    x_ref:       (1, L, CP)   channel-padded input
    scales_ref:  (A, CP)      folded BN scales, one row per BN op (padded lanes = 0)
    shifts_ref:  (A, CP)      folded BN shifts (padded lanes = 0)
    weights_ref: (WR, CP)     all conv weights stacked along rows, bf16
    cls_b_ref:   (1, CP)      classifier bias (padded lanes = 0)
    o_ref:       (1, L, CP)   lane-dense output slab (cols >= num_classes are 0)
    h_ref:       VMEM (L, CP) running dense-block feature map (f32)
    hp_ref:      VMEM (L+2*PAD_ROWS, CP) zero-halo buffer for K=3 taps / pooling
    """
    L = h_ref.shape[0]

    def affine_relu(v, row):
        # Folded BatchNorm (inference) + ReLU, f32 on the VPU.
        sc = scales_ref[row:row + 1, :]
        sh = shifts_ref[row:row + 1, :]
        return jnp.maximum(v * sc + sh, 0.0)

    def taps3(v):
        # Write v into the middle of the zero-halo buffer once, then read the
        # +/-1 shifted views as slices (halo rows are always zero).
        hp_ref[PAD_ROWS:PAD_ROWS + L, :] = v
        hp = hp_ref[...]
        left = hp[PAD_ROWS - 1:PAD_ROWS - 1 + L, :]    # v[l-1], zero at l=0
        right = hp[PAD_ROWS + 1:PAD_ROWS + 1 + L, :]   # v[l+1], zero at l=L-1
        return left, v, right

    def conv(v, w_row, K):
        # Conv1d(K, stride=1, pad=(K-1)//2) as ONE lane-dense bf16 matmul.
        if K == 1:
            hs = v
        else:
            left, center, right = taps3(v)
            hs = jnp.concatenate([left, center, right], axis=-1)   # (L, 3*CP)
        w = weights_ref[w_row:w_row + K * CP, :]                   # (K*CP, CP) bf16
        return jnp.dot(hs.astype(jnp.bfloat16), w,
                       preferred_element_type=jnp.float32)

    def pool3(v, mode):
        # {Max,Avg}Pool1d(k=3, s=1, p=1). Zero halo: max-pool input is
        # post-ReLU (>= 0) so a 0 halo is equivalent to -inf padding;
        # avg-pool uses count_include_pad=True, i.e. 0 padding and /3.
        left, center, right = taps3(v)
        if mode == "max":
            return jnp.maximum(jnp.maximum(left, center), right)
        return (left + center + right) * (1.0 / 3.0)

    # Zero the halo buffer once; only the middle rows are ever overwritten.
    hp_ref[...] = jnp.zeros(hp_ref.shape, hp_ref.dtype)

    x = x_ref[0]                                   # (L, CP) f32, padded lanes 0

    for op in program:                             # fully unrolled at trace time
        kind = op[0]
        if kind == "stem":
            _, w_row, aff = op
            pre = conv(x, w_row, 3)                              # conv0
            h_ref[...] = pool3(affine_relu(pre, aff), "max")     # norm0+relu+pool0
        elif kind == "dense":
            _, aff1, w1, aff2, w2 = op
            h = h_ref[...]
            t = conv(affine_relu(h, aff1), w1, 1)                # 1x1 bottleneck
            new = conv(affine_relu(t, aff2), w2, 3)              # 3x conv; its real
            # output columns sit at the concat offset (baked into the weight),
            # all other columns are exactly 0 -> dense concat == full-width add.
            h_ref[...] = h + new
        elif kind == "transition":
            _, aff, w_row = op
            t = conv(affine_relu(h_ref[...], aff), w_row, 1)
            h_ref[...] = pool3(t, "avg")
        else:  # "classifier": norm5 -> ReLU -> per-position Linear + bias
            _, aff, w_row = op
            out = conv(affine_relu(h_ref[...], aff), w_row, 1) + cls_b_ref[...]
            o_ref[0] = out.astype(o_ref.dtype)


def densenet_forward(x_nlc, packed):
    """x_nlc: (N, L, C_in) -> (N, L, num_classes)."""
    N, L, cin = x_nlc.shape
    x_pad = jnp.pad(x_nlc.astype(jnp.float32), ((0, 0), (0, 0), (0, CP - cin)))

    scales, shifts = packed["scales"], packed["shifts"]
    weights, cls_b = packed["weights"], packed["cls_b"]
    A, WR = scales.shape[0], weights.shape[0]

    kernel = functools.partial(_densenet_kernel, program=packed["program"])
    out_pad = pl.pallas_call(
        kernel,
        out_shape=jax.ShapeDtypeStruct((N, L, CP), jnp.float32),
        grid=(N,),
        in_specs=[
            pl.BlockSpec((1, L, CP), lambda n: (n, 0, 0)),   # input
            pl.BlockSpec((A, CP), lambda n: (0, 0)),         # packed BN scales
            pl.BlockSpec((A, CP), lambda n: (0, 0)),         # packed BN shifts
            pl.BlockSpec((WR, CP), lambda n: (0, 0)),        # packed conv weights
            pl.BlockSpec((1, CP), lambda n: (0, 0)),         # classifier bias
        ],
        out_specs=pl.BlockSpec((1, L, CP), lambda n: (n, 0, 0)),
        scratch_shapes=[
            pltpu.VMEM((L, CP), jnp.float32),                 # dense feature map
            pltpu.VMEM((L + 2 * PAD_ROWS, CP), jnp.float32),  # zero-halo buffer
        ],
        compiler_params=pltpu.CompilerParams(
            dimension_semantics=("parallel",)),               # 2 TCs on v7x
    )(x_pad, scales, shifts, weights, cls_b)

    return out_pad[:, :, :packed["num_classes"]]


# ---------------------------------------------------------------------------
# Parameters (deterministic, synthetic) — same layout as the PyTorch module
# ---------------------------------------------------------------------------
def _bn_affine(key, C, eps=1e-5):
    k1, k2, k3, k4 = jax.random.split(key, 4)
    gamma = 1.0 + 0.1 * jax.random.normal(k1, (C,), jnp.float32)
    beta = 0.1 * jax.random.normal(k2, (C,), jnp.float32)
    mean = 0.1 * jax.random.normal(k3, (C,), jnp.float32)
    var = 0.5 + jax.random.uniform(k4, (C,), dtype=jnp.float32)
    scale = gamma / jnp.sqrt(var + eps)
    shift = beta - mean * scale
    return scale.reshape(1, C), shift.reshape(1, C)


def make_params(key, *, channel_number, num_init_features, bn_size,
                growth_rate, block_config, num_classes):
    kiter = iter(jax.random.split(key, 512))

    def conv_w(K, cin, cout):
        w = jax.random.normal(next(kiter), (K, cin, cout), jnp.float32)
        return w * (1.0 / np.sqrt(K * cin))

    params = {
        "conv0": conv_w(3, channel_number, num_init_features),
        "norm0": _bn_affine(next(kiter), num_init_features),
    }
    nf = num_init_features
    blocks = []
    for i, num_layers in enumerate(block_config):
        layers = []
        for j in range(num_layers):
            cin = nf + j * growth_rate
            layers.append({
                "bn1": _bn_affine(next(kiter), cin),
                "w1": conv_w(1, cin, bn_size * growth_rate),
                "bn2": _bn_affine(next(kiter), bn_size * growth_rate),
                "w2": conv_w(3, bn_size * growth_rate, growth_rate),
            })
        nf = nf + num_layers * growth_rate
        trans = None
        if i != len(block_config) - 1:
            trans = {"bn": _bn_affine(next(kiter), nf),
                     "w": conv_w(1, nf, nf // 2)}
            nf = nf // 2
        blocks.append((layers, trans))
    params["blocks"] = blocks
    params["norm5"] = _bn_affine(next(kiter), nf)
    params["cls_w"] = conv_w(1, nf, num_classes)
    params["cls_b"] = 0.1 * jax.random.normal(next(kiter), (1, num_classes),
                                              jnp.float32)
    return params


# ---------------------------------------------------------------------------
# Pack every BN/conv parameter into lane-dense slabs + a static op program
# ---------------------------------------------------------------------------
def pack_network(params, *, channel_number, num_init_features, bn_size,
                 growth_rate, block_config, num_classes):
    del channel_number  # baked into conv0's weight shape
    scales_l, shifts_l, w_chunks, program = [], [], [], []
    w_rows = 0

    def add_affine(aff, cin):
        sc, sh = aff
        s = np.zeros((CP,), np.float32)
        b = np.zeros((CP,), np.float32)
        s[:cin] = np.asarray(sc).reshape(-1)[:cin]    # padded lanes: scale = 0
        b[:cin] = np.asarray(sh).reshape(-1)[:cin]    # padded lanes: shift = 0
        scales_l.append(s)
        shifts_l.append(b)
        return len(scales_l) - 1

    def add_weight(w, out_off=0):
        # w: (K, cin, cout) -> (K*CP, CP); real outputs at columns
        # [out_off, out_off + cout), everything else exactly 0.
        nonlocal w_rows
        w = np.asarray(w)
        K, cin, cout = w.shape
        wp = np.zeros((K * CP, CP), np.float32)
        for k in range(K):
            wp[k * CP:k * CP + cin, out_off:out_off + cout] = w[k]
        row = w_rows
        w_chunks.append(wp)
        w_rows += K * CP
        return row

    nf = num_init_features
    program.append(("stem",
                    add_weight(params["conv0"]),
                    add_affine(params["norm0"], nf)))

    for layers, trans in params["blocks"]:
        for j, lp in enumerate(layers):
            cin = nf + j * growth_rate
            program.append((
                "dense",
                add_affine(lp["bn1"], cin),
                add_weight(lp["w1"]),                  # bottleneck -> cols [0, bn*g)
                add_affine(lp["bn2"], bn_size * growth_rate),
                add_weight(lp["w2"], out_off=cin),     # new features at concat offset
            ))
        nf = nf + len(layers) * growth_rate
        if trans is not None:
            program.append(("transition",
                            add_affine(trans["bn"], nf),
                            add_weight(trans["w"])))
            nf = nf // 2

    program.append(("classifier",
                    add_affine(params["norm5"], nf),
                    add_weight(params["cls_w"])))

    # Pad the affine table to a multiple of 8 rows (sublane alignment).
    a_pad = -(-len(scales_l) // 8) * 8
    while len(scales_l) < a_pad:
        scales_l.append(np.zeros((CP,), np.float32))
        shifts_l.append(np.zeros((CP,), np.float32))

    cls_b = np.zeros((1, CP), np.float32)
    cls_b[0, :num_classes] = np.asarray(params["cls_b"]).reshape(-1)

    return dict(
        scales=jnp.asarray(np.stack(scales_l)),
        shifts=jnp.asarray(np.stack(shifts_l)),
        weights=jnp.asarray(np.concatenate(w_chunks, axis=0)).astype(jnp.bfloat16),
        cls_b=jnp.asarray(cls_b),
        program=tuple(program),
        num_classes=num_classes,
    )


# ---------------------------------------------------------------------------
# Pure-JAX f32 reference (correctness check)
# ---------------------------------------------------------------------------
def ref_forward(x, params):
    HI = jax.lax.Precision.HIGHEST

    def conv(h, w):
        K = w.shape[0]
        pad = (K - 1) // 2
        L = h.shape[1]
        hp = jnp.pad(h, ((0, 0), (pad, pad), (0, 0)))
        out = 0.0
        for k in range(K):
            out = out + jnp.einsum("nlc,cd->nld", hp[:, k:k + L, :], w[k],
                                   precision=HI)
        return out

    def maxpool(h):
        L = h.shape[1]
        hp = jnp.pad(h, ((0, 0), (1, 1), (0, 0)), constant_values=-jnp.inf)
        return jnp.maximum(jnp.maximum(hp[:, 0:L], hp[:, 1:L + 1]),
                           hp[:, 2:L + 2])

    def avgpool(h):
        L = h.shape[1]
        hp = jnp.pad(h, ((0, 0), (1, 1), (0, 0)))
        return (hp[:, 0:L] + hp[:, 1:L + 1] + hp[:, 2:L + 2]) / 3.0

    h = conv(x, params["conv0"])
    s0, b0 = params["norm0"]
    h = maxpool(jnp.maximum(h * s0 + b0, 0.0))
    for layers, trans in params["blocks"]:
        for lp in layers:
            s1, sh1 = lp["bn1"]
            s2, sh2 = lp["bn2"]
            t = conv(jnp.maximum(h * s1 + sh1, 0.0), lp["w1"])
            new = conv(jnp.maximum(t * s2 + sh2, 0.0), lp["w2"])
            h = jnp.concatenate([h, new], axis=-1)
        if trans is not None:
            st, sht = trans["bn"]
            h = avgpool(conv(jnp.maximum(h * st + sht, 0.0), trans["w"]))
    s5, b5 = params["norm5"]
    out = conv(jnp.maximum(h * s5 + b5, 0.0), params["cls_w"]) + params["cls_b"]
    return out


# ---------------------------------------------------------------------------
if __name__ == "__main__":
    key = jax.random.PRNGKey(0)
    N, L = 2, 16
    cfg = dict(channel_number=4, num_init_features=16, bn_size=2,
               growth_rate=8, block_config=(2, 2), num_classes=9)

    pkey, xkey = jax.random.split(key)
    params = make_params(pkey, **cfg)
    packed = pack_network(params, **cfg)

    # PyTorch input layout is NCL = (N, channel_number, L); kernel layout is NLC.
    x_ncl = jax.random.normal(xkey, (N, cfg["channel_number"], L), jnp.float32)
    x_nlc = jnp.transpose(x_ncl, (0, 2, 1))

    fwd = jax.jit(lambda xx: densenet_forward(xx, packed))
    out = jax.block_until_ready(fwd(x_nlc))
    assert out.shape == (N, L, cfg["num_classes"]), out.shape

    ref = jax.block_until_ready(ref_forward(x_nlc, params))
    # Tolerance accounts for bf16 MXU operands (f32 accumulation) vs f32 ref.
    np.testing.assert_allclose(np.asarray(out), np.asarray(ref),
                               rtol=5e-2, atol=5e-2)
    print("KERNEL_OK")
</pallas_src>

<mosaic_0001>
module attributes {stable_mosaic.version = 11 : i64} {
  func.func @_densenet_kernel(%arg0: i32, %arg1: memref<1x16x128xf32, #tpu.memory_space<vmem>>, %arg2: memref<16x128xf32, #tpu.memory_space<vmem>>, %arg3: memref<16x128xf32, #tpu.memory_space<vmem>>, %arg4: memref<2688x128xbf16, #tpu.memory_space<vmem>>, %arg5: memref<1x128xf32, #tpu.memory_space<vmem>>, %arg6: memref<1x16x128xf32, #tpu.memory_space<vmem>>, %arg7: memref<16x128xf32, #tpu.memory_space<vmem>>, %arg8: memref<32x128xf32, #tpu.memory_space<vmem>>) attributes {dimension_semantics = [#tpu.dimension_semantics<parallel>], iteration_bounds = array<i64: 2>, scalar_prefetch = 0 : i64, scratch_operands = 2 : i64, tpu.core_type = #tpu.core_type<tc>, window_params = [{transform_indices = @transform_0, window_bounds = array<i64: 1, 16, 128>}, {pipeline_mode = #tpu.pipeline_mode<synchronous>, transform_indices = @transform_1, window_bounds = array<i64: 16, 128>}, {pipeline_mode = #tpu.pipeline_mode<synchronous>, transform_indices = @transform_2, window_bounds = array<i64: 16, 128>}, {pipeline_mode = #tpu.pipeline_mode<synchronous>, transform_indices = @transform_3, window_bounds = array<i64: 2688, 128>}, {pipeline_mode = #tpu.pipeline_mode<synchronous>, transform_indices = @transform_4, window_bounds = array<i64: 1, 128>}, {transform_indices = @transform_5, window_bounds = array<i64: 1, 16, 128>}]} {
    %cst = arith.constant 0.000000e+00 : f32
    %0 = vector.broadcast %cst : f32 to vector<32x128xf32>
    %c0 = arith.constant 0 : index
    %c0_0 = arith.constant 0 : index
    %1 = vector.load %arg8[%c0, %c0_0] : memref<32x128xf32, #tpu.memory_space<vmem>>, vector<32x128xf32>
    tpu.vector_store %arg8[%c0, %c0_0], %0 {strides = array<i32>} : memref<32x128xf32, #tpu.memory_space<vmem>>, vector<32x128xf32>,
    %c0_1 = arith.constant 0 : index
    %c0_2 = arith.constant 0 : index
    %c0_3 = arith.constant 0 : index
    %2 = vector.load %arg1[%c0_1, %c0_2, %c0_3] : memref<1x16x128xf32, #tpu.memory_space<vmem>>, vector<1x16x128xf32>
    %3 = vector.shape_cast %2 : vector<1x16x128xf32> to vector<16x128xf32>
    %c8 = arith.constant 8 : index
    %c0_4 = arith.constant 0 : index
    %4 = vector.load %arg8[%c8, %c0_4] : memref<32x128xf32, #tpu.memory_space<vmem>>, vector<16x128xf32>
    tpu.vector_store %arg8[%c8, %c0_4], %3 {strides = array<i32>} : memref<32x128xf32, #tpu.memory_space<vmem>>, vector<16x128xf32>,
    %c0_5 = arith.constant 0 : index
    %c0_6 = arith.constant 0 : index
    %5 = vector.load %arg8[%c0_5, %c0_6] : memref<32x128xf32, #tpu.memory_space<vmem>>, vector<32x128xf32>
    %6 = vector.extract_strided_slice %5 {offsets = [7, 0], sizes = [16, 128], strides = [1, 1]} : vector<32x128xf32> to vector<16x128xf32>
    %7 = vector.extract_strided_slice %5 {offsets = [9, 0], sizes = [16, 128], strides = [1, 1]} : vector<32x128xf32> to vector<16x128xf32>
    %8 = tpu.concatenate %6, %3, %7 in 1 : vector<16x128xf32>, vector<16x128xf32>, vector<16x128xf32> -> vector<16x384xf32>
    %c0_7 = arith.constant 0 : index
    %c0_8 = arith.constant 0 : index
    %9 = vector.load %arg4[%c0_7, %c0_8] : memref<2688x128xbf16, #tpu.memory_space<vmem>>, vector<384x128xbf16>
    %10 = arith.truncf %8 : vector<16x384xf32> to vector<16x384xbf16>
    %cst_9 = arith.constant dense<0.000000e+00> : vector<16x128xf32>
    %11 = tpu.matmul %10, %9, %cst_9 {dimension_numbers = #tpu.dot_dimension_numbers<[1], [0], [0], [1], [0, 0, 1, 1], [], []>} : vector<16x384xbf16>, vector<384x128xbf16>, vector<16x128xf32> -> vector<16x128xf32>
    %c0_10 = arith.constant 0 : index
    %c0_11 = arith.constant 0 : index
    %12 = vector.load %arg2[%c0_10, %c0_11] : memref<16x128xf32, #tpu.memory_space<vmem>>, vector<1x128xf32>
    %c0_12 = arith.constant 0 : index
    %c0_13 = arith.constant 0 : index
    %13 = vector.load %arg3[%c0_12, %c0_13] : memref<16x128xf32, #tpu.memory_space<vmem>>, vector<1x128xf32>
    %14 = vector.broadcast %12 : vector<1x128xf32> to vector<16x128xf32>
    %15 = arith.mulf %11, %14 : vector<16x128xf32>
    %16 = vector.broadcast %13 : vector<1x128xf32> to vector<16x128xf32>
    %17 = arith.addf %15, %16 : vector<16x128xf32>
    %cst_14 = arith.constant 0.000000e+00 : f32
    %18 = vector.broadcast %cst_14 : f32 to vector<16x128xf32>
    %19 = arith.maximumf %17, %18 : vector<16x128xf32>
    %c8_15 = arith.constant 8 : index
    %c0_16 = arith.constant 0 : index
    %20 = vector.load %arg8[%c8_15, %c0_16] : memref<32x128xf32, #tpu.memory_space<vmem>>, vector<16x128xf32>
    tpu.vector_store %arg8[%c8_15, %c0_16], %19 {strides = array<i32>} : memref<32x128xf32, #tpu.memory_space<vmem>>, vector<16x128xf32>,
    %c0_17 = arith.constant 0 : index
    %c0_18 = arith.constant 0 : index
    %21 = vector.load %arg8[%c0_17, %c0_18] : memref<32x128xf32, #tpu.memory_space<vmem>>, vector<32x128xf32>
    %22 = vector.extract_strided_slice %21 {offsets = [7, 0], sizes = [16, 128], strides = [1, 1]} : vector<32x128xf32> to vector<16x128xf32>
    %23 = vector.extract_strided_slice %21 {offsets = [9, 0], sizes = [16, 128], strides = [1, 1]} : vector<32x128xf32> to vector<16x128xf32>
    %24 = arith.maximumf %22, %19 : vector<16x128xf32>
    %25 = arith.maximumf %24, %23 : vector<16x128xf32>
    %c0_19 = arith.constant 0 : index
    %c0_20 = arith.constant 0 : index
    %26 = vector.load %arg7[%c0_19, %c0_20] : memref<16x128xf32, #tpu.memory_space<vmem>>, vector<16x128xf32>
    tpu.vector_store %arg7[%c0_19, %c0_20], %25 {strides = array<i32>} : memref<16x128xf32, #tpu.memory_space<vmem>>, vector<16x128xf32>,
    %c0_21 = arith.constant 0 : index
    %c0_22 = arith.constant 0 : index
    %27 = vector.load %arg7[%c0_21, %c0_22] : memref<16x128xf32, #tpu.memory_space<vmem>>, vector<16x128xf32>
    %c1 = arith.constant 1 : index
    %c0_23 = arith.constant 0 : index
    %28 = vector.load %arg2[%c1, %c0_23] : memref<16x128xf32, #tpu.memory_space<vmem>>, vector<1x128xf32>
    %c1_24 = arith.constant 1 : index
    %c0_25 = arith.constant 0 : index
    %29 = vector.load %arg3[%c1_24, %c0_25] : memref<16x128xf32, #tpu.memory_space<vmem>>, vector<1x128xf32>
    %30 = vector.broadcast %28 : vector<1x128xf32> to vector<16x128xf32>
    %31 = arith.mulf %27, %30 : vector<16x128xf32>
    %32 = vector.broadcast %29 : vector<1x128xf32> to vector<16x128xf32>
    %33 = arith.addf %31, %32 : vector<16x128xf32>
    %cst_26 = arith.constant 0.000000e+00 : f32
    %34 = vector.broadcast %cst_26 : f32 to vector<16x128xf32>
    %35 = arith.maximumf %33, %34 : vector<16x128xf32>
    %c384 = arith.constant 384 : index
    %c0_27 = arith.constant 0 : index
    %36 = vector.load %arg4[%c384, %c0_27] : memref<2688x128xbf16, #tpu.memory_space<vmem>>, vector<128x128xbf16>
    %37 = arith.truncf %35 : vector<16x128xf32> to vector<16x128xbf16>
    %cst_28 = arith.constant dense<0.000000e+00> : vector<16x128xf32>
    %38 = tpu.matmul %37, %36, %cst_28 {dimension_numbers = #tpu.dot_dimension_numbers<[1], [0], [0], [1], [0, 0, 1, 1], [], []>} : vector<16x128xbf16>, vector<128x128xbf16>, vector<16x128xf32> -> vector<16x128xf32>
    %c2 = arith.constant 2 : index
    %c0_29 = arith.constant 0 : index
    %39 = vector.load %arg2[%c2, %c0_29] : memref<16x128xf32, #tpu.memory_space<vmem>>, vector<1x128xf32>
    %c2_30 = arith.constant 2 : index
    %c0_31 = arith.constant 0 : index
    %40 = vector.load %arg3[%c2_30, %c0_31] : memref<16x128xf32, #tpu.memory_space<vmem>>, vector<1x128xf32>
    %41 = vector.broadcast %39 : vector<1x128xf32> to vector<16x128xf32>
    %42 = arith.mulf %38, %41 : vector<16x128xf32>
    %43 = vector.broadcast %40 : vector<1x128xf32> to vector<16x128xf32>
    %44 = arith.addf %42, %43 : vector<16x128xf32>
    %cst_32 = arith.constant 0.000000e+00 : f32
    %45 = vector.broadcast %cst_32 : f32 to vector<16x128xf32>
    %46 = arith.maximumf %44, %45 : vector<16x128xf32>
    %c8_33 = arith.constant 8 : index
    %c0_34 = arith.constant 0 : index
    %47 = vector.load %arg8[%c8_33, %c0_34] : memref<32x128xf32, #tpu.memory_space<vmem>>, vector<16x128xf32>
    tpu.vector_store %arg8[%c8_33, %c0_34], %46 {strides = array<i32>} : memref<32x128xf32, #tpu.memory_space<vmem>>, vector<16x128xf32>,
    %c0_35 = arith.constant 0 : index
    %c0_36 = arith.constant 0 : index
    %48 = vector.load %arg8[%c0_35, %c0_36] : memref<32x128xf32, #tpu.memory_space<vmem>>, vector<32x128xf32>
    %49 = vector.extract_strided_slice %48 {offsets = [7, 0], sizes = [16, 128], strides = [1, 1]} : vector<32x128xf32> to vector<16x128xf32>
    %50 = vector.extract_strided_slice %48 {offsets = [9, 0], sizes = [16, 128], strides = [1, 1]} : vector<32x128xf32> to vector<16x128xf32>
    %51 = tpu.concatenate %49, %46, %50 in 1 : vector<16x128xf32>, vector<16x128xf32>, vector<16x128xf32> -> vector<16x384xf32>
    %c512 = arith.constant 512 : index
    %c0_37 = arith.constant 0 : index
    %52 = vector.load %arg4[%c512, %c0_37] : memref<2688x128xbf16, #tpu.memory_space<vmem>>, vector<384x128xbf16>
    %53 = arith.truncf %51 : vector<16x384xf32> to vector<16x384xbf16>
    %cst_38 = arith.constant dense<0.000000e+00> : vector<16x128xf32>
    %54 = tpu.matmul %53, %52, %cst_38 {dimension_numbers = #tpu.dot_dimension_numbers<[1], [0], [0], [1], [0, 0, 1, 1], [], []>} : vector<16x384xbf16>, vector<384x128xbf16>, vector<16x128xf32> -> vector<16x128xf32>
    %55 = arith.addf %27, %54 : vector<16x128xf32>
    %c0_39 = arith.constant 0 : index
    %c0_40 = arith.constant 0 : index
    %56 = vector.load %arg7[%c0_39, %c0_40] : memref<16x128xf32, #tpu.memory_space<vmem>>, vector<16x128xf32>
    tpu.vector_store %arg7[%c0_39, %c0_40], %55 {strides = array<i32>} : memref<16x128xf32, #tpu.memory_space<vmem>>, vector<16x128xf32>,
    %c0_41 = arith.constant 0 : index
    %c0_42 = arith.constant 0 : index
    %57 = vector.load %arg7[%c0_41, %c0_42] : memref<16x128xf32, #tpu.memory_space<vmem>>, vector<16x128xf32>
    %c3 = arith.constant 3 : index
    %c0_43 = arith.constant 0 : index
    %58 = vector.load %arg2[%c3, %c0_43] : memref<16x128xf32, #tpu.memory_space<vmem>>, vector<1x128xf32>
    %c3_44 = arith.constant 3 : index
    %c0_45 = arith.constant 0 : index
    %59 = vector.load %arg3[%c3_44, %c0_45] : memref<16x128xf32, #tpu.memory_space<vmem>>, vector<1x128xf32>
    %60 = vector.broadcast %58 : vector<1x128xf32> to vector<16x128xf32>
    %61 = arith.mulf %57, %60 : vector<16x128xf32>
    %62 = vector.broadcast %59 : vector<1x128xf32> to vector<16x128xf32>
    %63 = arith.addf %61, %62 : vector<16x128xf32>
    %cst_46 = arith.constant 0.000000e+00 : f32
    %64 = vector.broadcast %cst_46 : f32 to vector<16x128xf32>
    %65 = arith.maximumf %63, %64 : vector<16x128xf32>
    %c896 = arith.constant 896 : index
    %c0_47 = arith.constant 0 : index
    %66 = vector.load %arg4[%c896, %c0_47] : memref<2688x128xbf16, #tpu.memory_space<vmem>>, vector<128x128xbf16>
    %67 = arith.truncf %65 : vector<16x128xf32> to vector<16x128xbf16>
    %cst_48 = arith.constant dense<0.000000e+00> : vector<16x128xf32>
    %68 = tpu.matmul %67, %66, %cst_48 {dimension_numbers = #tpu.dot_dimension_numbers<[1], [0], [0], [1], [0, 0, 1, 1], [], []>} : vector<16x128xbf16>, vector<128x128xbf16>, vector<16x128xf32> -> vector<16x128xf32>
    %c4 = arith.constant 4 : index
    %c0_49 = arith.constant 0 : index
    %69 = vector.load %arg2[%c4, %c0_49] : memref<16x128xf32, #tpu.memory_space<vmem>>, vector<1x128xf32>
    %c4_50 = arith.constant 4 : index
    %c0_51 = arith.constant 0 : index
    %70 = vector.load %arg3[%c4_50, %c0_51] : memref<16x128xf32, #tpu.memory_space<vmem>>, vector<1x128xf32>
    %71 = vector.broadcast %69 : vector<1x128xf32> to vector<16x128xf32>
    %72 = arith.mulf %68, %71 : vector<16x128xf32>
    %73 = vector.broadcast %70 : vector<1x128xf32> to vector<16x128xf32>
    %74 = arith.addf %72, %73 : vector<16x128xf32>
    %cst_52 = arith.constant 0.000000e+00 : f32
    %75 = vector.broadcast %cst_52 : f32 to vector<16x128xf32>
    %76 = arith.maximumf %74, %75 : vector<16x128xf32>
    %c8_53 = arith.constant 8 : index
    %c0_54 = arith.constant 0 : index
    %77 = vector.load %arg8[%c8_53, %c0_54] : memref<32x128xf32, #tpu.memory_space<vmem>>, vector<16x128xf32>
    tpu.vector_store %arg8[%c8_53, %c0_54], %76 {strides = array<i32>} : memref<32x128xf32, #tpu.memory_space<vmem>>, vector<16x128xf32>,
    %c0_55 = arith.constant 0 : index
    %c0_56 = arith.constant 0 : index
    %78 = vector.load %arg8[%c0_55, %c0_56] : memref<32x128xf32, #tpu.memory_space<vmem>>, vector<32x128xf32>
    %79 = vector.extract_strided_slice %78 {offsets = [7, 0], sizes = [16, 128], strides = [1, 1]} : vector<32x128xf32> to vector<16x128xf32>
    %80 = vector.extract_strided_slice %78 {offsets = [9, 0], sizes = [16, 128], strides = [1, 1]} : vector<32x128xf32> to vector<16x128xf32>
    %81 = tpu.concatenate %79, %76, %80 in 1 : vector<16x128xf32>, vector<16x128xf32>, vector<16x128xf32> -> vector<16x384xf32>
    %c1024 = arith.constant 1024 : index
    %c0_57 = arith.constant 0 : index
    %82 = vector.load %arg4[%c1024, %c0_57] : memref<2688x128xbf16, #tpu.memory_space<vmem>>, vector<384x128xbf16>
    %83 = arith.truncf %81 : vector<16x384xf32> to vector<16x384xbf16>
    %cst_58 = arith.constant dense<0.000000e+00> : vector<16x128xf32>
    %84 = tpu.matmul %83, %82, %cst_58 {dimension_numbers = #tpu.dot_dimension_numbers<[1], [0], [0], [1], [0, 0, 1, 1], [], []>} : vector<16x384xbf16>, vector<384x128xbf16>, vector<16x128xf32> -> vector<16x128xf32>
    %85 = arith.addf %57, %84 : vector<16x128xf32>
    %c0_59 = arith.constant 0 : index
    %c0_60 = arith.constant 0 : index
    %86 = vector.load %arg7[%c0_59, %c0_60] : memref<16x128xf32, #tpu.memory_space<vmem>>, vector<16x128xf32>
    tpu.vector_store %arg7[%c0_59, %c0_60], %85 {strides = array<i32>} : memref<16x128xf32, #tpu.memory_space<vmem>>, vector<16x128xf32>,
    %c0_61 = arith.constant 0 : index
    %c0_62 = arith.constant 0 : index
    %87 = vector.load %arg7[%c0_61, %c0_62] : memref<16x128xf32, #tpu.memory_space<vmem>>, vector<16x128xf32>
    %c5 = arith.constant 5 : index
    %c0_63 = arith.constant 0 : index
    %88 = vector.load %arg2[%c5, %c0_63] : memref<16x128xf32, #tpu.memory_space<vmem>>, vector<1x128xf32>
    %c5_64 = arith.constant 5 : index
    %c0_65 = arith.constant 0 : index
    %89 = vector.load %arg3[%c5_64, %c0_65] : memref<16x128xf32, #tpu.memory_space<vmem>>, vector<1x128xf32>
    %90 = vector.broadcast %88 : vector<1x128xf32> to vector<16x128xf32>
    %91 = arith.mulf %87, %90 : vector<16x128xf32>
    %92 = vector.broadcast %89 : vector<1x128xf32> to vector<16x128xf32>
    %93 = arith.addf %91, %92 : vector<16x128xf32>
    %cst_66 = arith.constant 0.000000e+00 : f32
    %94 = vector.broadcast %cst_66 : f32 to vector<16x128xf32>
    %95 = arith.maximumf %93, %94 : vector<16x128xf32>
    %c1408 = arith.constant 1408 : index
    %c0_67 = arith.constant 0 : index
    %96 = vector.load %arg4[%c1408, %c0_67] : memref<2688x128xbf16, #tpu.memory_space<vmem>>, vector<128x128xbf16>
    %97 = arith.truncf %95 : vector<16x128xf32> to vector<16x128xbf16>
    %cst_68 = arith.constant dense<0.000000e+00> : vector<16x128xf32>
    %98 = tpu.matmul %97, %96, %cst_68 {dimension_numbers = #tpu.dot_dimension_numbers<[1], [0], [0], [1], [0, 0, 1, 1], [], []>} : vector<16x128xbf16>, vector<128x128xbf16>, vector<16x128xf32> -> vector<16x128xf32>
    %c8_69 = arith.constant 8 : index
    %c0_70 = arith.constant 0 : index
    %99 = vector.load %arg8[%c8_69, %c0_70] : memref<32x128xf32, #tpu.memory_space<vmem>>, vector<16x128xf32>
    tpu.vector_store %arg8[%c8_69, %c0_70], %98 {strides = array<i32>} : memref<32x128xf32, #tpu.memory_space<vmem>>, vector<16x128xf32>,
    %c0_71 = arith.constant 0 : index
    %c0_72 = arith.constant 0 : index
    %100 = vector.load %arg8[%c0_71, %c0_72] : memref<32x128xf32, #tpu.memory_space<vmem>>, vector<32x128xf32>
    %101 = vector.extract_strided_slice %100 {offsets = [7, 0], sizes = [16, 128], strides = [1, 1]} : vector<32x128xf32> to vector<16x128xf32>
    %102 = vector.extract_strided_slice %100 {offsets = [9, 0], sizes = [16, 128], strides = [1, 1]} : vector<32x128xf32> to vector<16x128xf32>
    %103 = arith.addf %101, %98 : vector<16x128xf32>
    %104 = arith.addf %103, %102 : vector<16x128xf32>
    %cst_73 = arith.constant 0.333333343 : f32
    %105 = vector.broadcast %cst_73 : f32 to vector<16x128xf32>
    %106 = arith.mulf %104, %105 : vector<16x128xf32>
    %c0_74 = arith.constant 0 : index
    %c0_75 = arith.constant 0 : index
    %107 = vector.load %arg7[%c0_74, %c0_75] : memref<16x128xf32, #tpu.memory_space<vmem>>, vector<16x128xf32>
    tpu.vector_store %arg7[%c0_74, %c0_75], %106 {strides = array<i32>} : memref<16x128xf32, #tpu.memory_space<vmem>>, vector<16x128xf32>,
    %c0_76 = arith.constant 0 : index
    %c0_77 = arith.constant 0 : index
    %108 = vector.load %arg7[%c0_76, %c0_77] : memref<16x128xf32, #tpu.memory_space<vmem>>, vector<16x128xf32>
    %c6 = arith.constant 6 : index
    %c0_78 = arith.constant 0 : index
    %109 = vector.load %arg2[%c6, %c0_78] : memref<16x128xf32, #tpu.memory_space<vmem>>, vector<1x128xf32>
    %c6_79 = arith.constant 6 : index
    %c0_80 = arith.constant 0 : index
    %110 = vector.load %arg3[%c6_79, %c0_80] : memref<16x128xf32, #tpu.memory_space<vmem>>, vector<1x128xf32>
    %111 = vector.broadcast %109 : vector<1x128xf32> to vector<16x128xf32>
    %112 = arith.mulf %108, %111 : vector<16x128xf32>
    %113 = vector.broadcast %110 : vector<1x128xf32> to vector<16x128xf32>
    %114 = arith.addf %112, %113 : vector<16x128xf32>
    %cst_81 = arith.constant 0.000000e+00 : f32
    %115 = vector.broadcast %cst_81 : f32 to vector<16x128xf32>
    %116 = arith.maximumf %114, %115 : vector<16x128xf32>
    %c1536 = arith.constant 1536 : index
    %c0_82 = arith.constant 0 : index
    %117 = vector.load %arg4[%c1536, %c0_82] : memref<2688x128xbf16, #tpu.memory_space<vmem>>, vector<128x128xbf16>
    %118 = arith.truncf %116 : vector<16x128xf32> to vector<16x128xbf16>
    %cst_83 = arith.constant dense<0.000000e+00> : vector<16x128xf32>
    %119 = tpu.matmul %118, %117, %cst_83 {dimension_numbers = #tpu.dot_dimension_numbers<[1], [0], [0], [1], [0, 0, 1, 1], [], []>} : vector<16x128xbf16>, vector<128x128xbf16>, vector<16x128xf32> -> vector<16x128xf32>
    %c7 = arith.constant 7 : index
    %c0_84 = arith.constant 0 : index
    %120 = vector.load %arg2[%c7, %c0_84] : memref<16x128xf32, #tpu.memory_space<vmem>>, vector<1x128xf32>
    %c7_85 = arith.constant 7 : index
    %c0_86 = arith.constant 0 : index
    %121 = vector.load %arg3[%c7_85, %c0_86] : memref<16x128xf32, #tpu.memory_space<vmem>>, vector<1x128xf32>
    %122 = vector.broadcast %120 : vector<1x128xf32> to vector<16x128xf32>
    %123 = arith.mulf %119, %122 : vector<16x128xf32>
    %124 = vector.broadcast %121 : vector<1x128xf32> to vector<16x128xf32>
    %125 = arith.addf %123, %124 : vector<16x128xf32>
    %cst_87 = arith.constant 0.000000e+00 : f32
    %126 = vector.broadcast %cst_87 : f32 to vector<16x128xf32>
    %127 = arith.maximumf %125, %126 : vector<16x128xf32>
    %c8_88 = arith.constant 8 : index
    %c0_89 = arith.constant 0 : index
    %128 = vector.load %arg8[%c8_88, %c0_89] : memref<32x128xf32, #tpu.memory_space<vmem>>, vector<16x128xf32>
    tpu.vector_store %arg8[%c8_88, %c0_89], %127 {strides = array<i32>} : memref<32x128xf32, #tpu.memory_space<vmem>>, vector<16x128xf32>,
    %c0_90 = arith.constant 0 : index
    %c0_91 = arith.constant 0 : index
    %129 = vector.load %arg8[%c0_90, %c0_91] : memref<32x128xf32, #tpu.memory_space<vmem>>, vector<32x128xf32>
    %130 = vector.extract_strided_slice %129 {offsets = [7, 0], sizes = [16, 128], strides = [1, 1]} : vector<32x128xf32> to vector<16x128xf32>
    %131 = vector.extract_strided_slice %129 {offsets = [9, 0], sizes = [16, 128], strides = [1, 1]} : vector<32x128xf32> to vector<16x128xf32>
    %132 = tpu.concatenate %130, %127, %131 in 1 : vector<16x128xf32>, vector<16x128xf32>, vector<16x128xf32> -> vector<16x384xf32>
    %c1664 = arith.constant 1664 : index
    %c0_92 = arith.constant 0 : index
    %133 = vector.load %arg4[%c1664, %c0_92] : memref<2688x128xbf16, #tpu.memory_space<vmem>>, vector<384x128xbf16>
    %134 = arith.truncf %132 : vector<16x384xf32> to vector<16x384xbf16>
    %cst_93 = arith.constant dense<0.000000e+00> : vector<16x128xf32>
    %135 = tpu.matmul %134, %133, %cst_93 {dimension_numbers = #tpu.dot_dimension_numbers<[1], [0], [0], [1], [0, 0, 1, 1], [], []>} : vector<16x384xbf16>, vector<384x128xbf16>, vector<16x128xf32> -> vector<16x128xf32>
    %136 = arith.addf %108, %135 : vector<16x128xf32>
    %c0_94 = arith.constant 0 : index
    %c0_95 = arith.constant 0 : index
    %137 = vector.load %arg7[%c0_94, %c0_95] : memref<16x128xf32, #tpu.memory_space<vmem>>, vector<16x128xf32>
    tpu.vector_store %arg7[%c0_94, %c0_95], %136 {strides = array<i32>} : memref<16x128xf32, #tpu.memory_space<vmem>>, vector<16x128xf32>,
    %c0_96 = arith.constant 0 : index
    %c0_97 = arith.constant 0 : index
    %138 = vector.load %arg7[%c0_96, %c0_97] : memref<16x128xf32, #tpu.memory_space<vmem>>, vector<16x128xf32>
    %c8_98 = arith.constant 8 : index
    %c0_99 = arith.constant 0 : index
    %139 = vector.load %arg2[%c8_98, %c0_99] : memref<16x128xf32, #tpu.memory_space<vmem>>, vector<1x128xf32>
    %c8_100 = arith.constant 8 : index
    %c0_101 = arith.constant 0 : index
    %140 = vector.load %arg3[%c8_100, %c0_101] : memref<16x128xf32, #tpu.memory_space<vmem>>, vector<1x128xf32>
    %141 = vector.broadcast %139 : vector<1x128xf32> to vector<16x128xf32>
    %142 = arith.mulf %138, %141 : vector<16x128xf32>
    %143 = vector.broadcast %140 : vector<1x128xf32> to vector<16x128xf32>
    %144 = arith.addf %142, %143 : vector<16x128xf32>
    %cst_102 = arith.constant 0.000000e+00 : f32
    %145 = vector.broadcast %cst_102 : f32 to vector<16x128xf32>
    %146 = arith.maximumf %144, %145 : vector<16x128xf32>
    %c2048 = arith.constant 2048 : index
    %c0_103 = arith.constant 0 : index
    %147 = vector.load %arg4[%c2048, %c0_103] : memref<2688x128xbf16, #tpu.memory_space<vmem>>, vector<128x128xbf16>
    %148 = arith.truncf %146 : vector<16x128xf32> to vector<16x128xbf16>
    %cst_104 = arith.constant dense<0.000000e+00> : vector<16x128xf32>
    %149 = tpu.matmul %148, %147, %cst_104 {dimension_numbers = #tpu.dot_dimension_numbers<[1], [0], [0], [1], [0, 0, 1, 1], [], []>} : vector<16x128xbf16>, vector<128x128xbf16>, vector<16x128xf32> -> vector<16x128xf32>
    %c9 = arith.constant 9 : index
    %c0_105 = arith.constant 0 : index
    %150 = vector.load %arg2[%c9, %c0_105] : memref<16x128xf32, #tpu.memory_space<vmem>>, vector<1x128xf32>
    %c9_106 = arith.constant 9 : index
    %c0_107 = arith.constant 0 : index
    %151 = vector.load %arg3[%c9_106, %c0_107] : memref<16x128xf32, #tpu.memory_space<vmem>>, vector<1x128xf32>
    %152 = vector.broadcast %150 : vector<1x128xf32> to vector<16x128xf32>
    %153 = arith.mulf %149, %152 : vector<16x128xf32>
    %154 = vector.broadcast %151 : vector<1x128xf32> to vector<16x128xf32>
    %155 = arith.addf %153, %154 : vector<16x128xf32>
    %cst_108 = arith.constant 0.000000e+00 : f32
    %156 = vector.broadcast %cst_108 : f32 to vector<16x128xf32>
    %157 = arith.maximumf %155, %156 : vector<16x128xf32>
    %c8_109 = arith.constant 8 : index
    %c0_110 = arith.constant 0 : index
    %158 = vector.load %arg8[%c8_109, %c0_110] : memref<32x128xf32, #tpu.memory_space<vmem>>, vector<16x128xf32>
    tpu.vector_store %arg8[%c8_109, %c0_110], %157 {strides = array<i32>} : memref<32x128xf32, #tpu.memory_space<vmem>>, vector<16x128xf32>,
    %c0_111 = arith.constant 0 : index
    %c0_112 = arith.constant 0 : index
    %159 = vector.load %arg8[%c0_111, %c0_112] : memref<32x128xf32, #tpu.memory_space<vmem>>, vector<32x128xf32>
    %160 = vector.extract_strided_slice %159 {offsets = [7, 0], sizes = [16, 128], strides = [1, 1]} : vector<32x128xf32> to vector<16x128xf32>
    %161 = vector.extract_strided_slice %159 {offsets = [9, 0], sizes = [16, 128], strides = [1, 1]} : vector<32x128xf32> to vector<16x128xf32>
    %162 = tpu.concatenate %160, %157, %161 in 1 : vector<16x128xf32>, vector<16x128xf32>, vector<16x128xf32> -> vector<16x384xf32>
    %c2176 = arith.constant 2176 : index
    %c0_113 = arith.constant 0 : index
    %163 = vector.load %arg4[%c2176, %c0_113] : memref<2688x128xbf16, #tpu.memory_space<vmem>>, vector<384x128xbf16>
    %164 = arith.truncf %162 : vector<16x384xf32> to vector<16x384xbf16>
    %cst_114 = arith.constant dense<0.000000e+00> : vector<16x128xf32>
    %165 = tpu.matmul %164, %163, %cst_114 {dimension_numbers = #tpu.dot_dimension_numbers<[1], [0], [0], [1], [0, 0, 1, 1], [], []>} : vector<16x384xbf16>, vector<384x128xbf16>, vector<16x128xf32> -> vector<16x128xf32>
    %166 = arith.addf %138, %165 : vector<16x128xf32>
    %c0_115 = arith.constant 0 : index
    %c0_116 = arith.constant 0 : index
    %167 = vector.load %arg7[%c0_115, %c0_116] : memref<16x128xf32, #tpu.memory_space<vmem>>, vector<16x128xf32>
    tpu.vector_store %arg7[%c0_115, %c0_116], %166 {strides = array<i32>} : memref<16x128xf32, #tpu.memory_space<vmem>>, vector<16x128xf32>,
    %c0_117 = arith.constant 0 : index
    %c0_118 = arith.constant 0 : index
    %168 = vector.load %arg7[%c0_117, %c0_118] : memref<16x128xf32, #tpu.memory_space<vmem>>, vector<16x128xf32>
    %c10 = arith.constant 10 : index
    %c0_119 = arith.constant 0 : index
    %169 = vector.load %arg2[%c10, %c0_119] : memref<16x128xf32, #tpu.memory_space<vmem>>, vector<1x128xf32>
    %c10_120 = arith.constant 10 : index
    %c0_121 = arith.constant 0 : index
    %170 = vector.load %arg3[%c10_120, %c0_121] : memref<16x128xf32, #tpu.memory_space<vmem>>, vector<1x128xf32>
    %171 = vector.broadcast %169 : vector<1x128xf32> to vector<16x128xf32>
    %172 = arith.mulf %168, %171 : vector<16x128xf32>
    %173 = vector.broadcast %170 : vector<1x128xf32> to vector<16x128xf32>
    %174 = arith.addf %172, %173 : vector<16x128xf32>
    %cst_122 = arith.constant 0.000000e+00 : f32
    %175 = vector.broadcast %cst_122 : f32 to vector<16x128xf32>
    %176 = arith.maximumf %174, %175 : vector<16x128xf32>
    %c2560 = arith.constant 2560 : index
    %c0_123 = arith.constant 0 : index
    %177 = vector.load %arg4[%c2560, %c0_123] : memref<2688x128xbf16, #tpu.memory_space<vmem>>, vector<128x128xbf16>
    %178 = arith.truncf %176 : vector<16x128xf32> to vector<16x128xbf16>
    %cst_124 = arith.constant dense<0.000000e+00> : vector<16x128xf32>
    %179 = tpu.matmul %178, %177, %cst_124 {dimension_numbers = #tpu.dot_dimension_numbers<[1], [0], [0], [1], [0, 0, 1, 1], [], []>} : vector<16x128xbf16>, vector<128x128xbf16>, vector<16x128xf32> -> vector<16x128xf32>
    %c0_125 = arith.constant 0 : index
    %c0_126 = arith.constant 0 : index
    %180 = vector.load %arg5[%c0_125, %c0_126] : memref<1x128xf32, #tpu.memory_space<vmem>>, vector<1x128xf32>
    %181 = vector.broadcast %180 : vector<1x128xf32> to vector<16x128xf32>
    %182 = arith.addf %179, %181 : vector<16x128xf32>
    %c0_127 = arith.constant 0 : index
    %c0_128 = arith.constant 0 : index
    %c0_129 = arith.constant 0 : index
    %183 = vector.load %arg6[%c0_127, %c0_128, %c0_129] : memref<1x16x128xf32, #tpu.memory_space<vmem>>, vector<1x16x128xf32>
    %184 = vector.shape_cast %183 : vector<1x16x128xf32> to vector<16x128xf32>
    %185 = vector.shape_cast %182 : vector<16x128xf32> to vector<1x16x128xf32>
    tpu.vector_store %arg6[%c0_127, %c0_128, %c0_129], %185 {strides = array<i32>} : memref<1x16x128xf32, #tpu.memory_space<vmem>>, vector<1x16x128xf32>,
    return
  }
  func.func @transform_0(%arg0: i32) -> (i32, i32, i32) {
    %c0_i32 = arith.constant 0 : i32
    %c0_i32_0 = arith.constant 0 : i32
    %c0_i32_1 = arith.constant 0 : i32
    return %arg0, %c0_i32, %c0_i32_0 : i32, i32, i32
  }
  func.func @transform_1(%arg0: i32) -> (i32, i32) {
    %c0_i32 = arith.constant 0 : i32
    %c0_i32_0 = arith.constant 0 : i32
    %c0_i32_1 = arith.constant 0 : i32
    return %c0_i32, %c0_i32_0 : i32, i32
  }
  func.func @transform_2(%arg0: i32) -> (i32, i32) {
    %c0_i32 = arith.constant 0 : i32
    %c0_i32_0 = arith.constant 0 : i32
    %c0_i32_1 = arith.constant 0 : i32
    return %c0_i32, %c0_i32_0 : i32, i32
  }
  func.func @transform_3(%arg0: i32) -> (i32, i32) {
    %c0_i32 = arith.constant 0 : i32
    %c0_i32_0 = arith.constant 0 : i32
    %c0_i32_1 = arith.constant 0 : i32
    return %c0_i32, %c0_i32_0 : i32, i32
  }
  func.func @transform_4(%arg0: i32) -> (i32, i32) {
    %c0_i32 = arith.constant 0 : i32
    %c0_i32_0 = arith.constant 0 : i32
    %c0_i32_1 = arith.constant 0 : i32
    return %c0_i32, %c0_i32_0 : i32, i32
  }
  func.func @transform_5(%arg0: i32) -> (i32, i32, i32) {
    %c0_i32 = arith.constant 0 : i32
    %c0_i32_0 = arith.constant 0 : i32
    %c0_i32_1 = arith.constant 0 : i32
    return %arg0, %c0_i32, %c0_i32_0 : i32, i32, i32
  }
}

</mosaic_0001>

<llo_original>
// kernel: _lambda_.1
$region0: #{_lambda_.1}
  #allocation0 [shape = 'u32[]', space=smem, size = 0x4, offset = 0x4, fixed_abs, tag = 'smem constant byte address 0x4 - core index']
  #allocation1 [shape = 'u32[144,128]{1,0:T(1,128)}', space=vmem, size = 0x12000, scoped, tag = 'internal scratch']
  #allocation2 [shape = 'f32[16,128]{1,0:T(8,128)}', space=vmem, size = 0x2000, scoped, tag = 'scratch operand']
  #allocation3 [shape = 'f32[32,128]{1,0:T(8,128)}', space=vmem, size = 0x4000, scoped, tag = 'scratch operand']
  %s0 = inlined_call_operand.vmem [shape: f32[2,16,128], index: 0, kind: input, shape index: {}]
  %s1 = inlined_call_operand.vmem [shape: f32[16,128], index: 1, kind: input, shape index: {}]
  %s2 = inlined_call_operand.vmem [shape: f32[16,128], index: 2, kind: input, shape index: {}]
  %s3 = inlined_call_operand.hbm [shape: bf16[2688,128], index: 3, kind: input, shape index: {}]
  %s4 = inlined_call_operand.vmem [shape: f32[1,128], index: 4, kind: input, shape index: {}]
  %s5 = inlined_call_operand.vmem [shape: f32[2,16,128], index: 5, kind: output, shape index: {}]
  %s6 = sld [smem:[#allocation0]]
  $region57: #{_lambda_.1} parent=0
    _
  %s8 = ssub.s32 1, %s6
  %s9 = scalar_select 0, %s8, %s6
  $region1: #{_lambda_.1} parent=0
    #allocation4 [shape = 'u8[688128]{0}', space=vmem, size = 0xa8000, scoped, tag = 'input window, operand 3, single buffered']
    #allocation5 [shape = 's32[2]{0}', space=sflag, size = 0x8, scoped, tag = 'scoped memory for _lambda_.1']
    %10 = vsyncpa [#allocation5], 0
    loop: start=0, step=1, limit=4
    $region2: #{_lambda_.1} parent=1 // loop_pre_header
      _
    $region3: #{_lambda_.1} parent=1 // loop_header
      %s12 = sphi 0, %s16
      %p13 = scmp.ge.s32.totalorder %s12, 4
      %s22 = sphi 0, %s24
      %s25 = sphi 0, %s22
      %s26 = sphi 0, %s25
      %s42 = sphi 0, %s26
      %s46 = sphi 0, %s46
      %s48 = sphi 0, %s46
      %s49 = sphi 0, %s48
      %s63 = sphi 0, %s49
      %s67 = sphi 0, %s67
      %s69 = sphi 0, %s67
      %s70 = sphi 0, %s69
      %s84 = sphi 0, %s70
      %s88 = sphi 0, %s88
      %s90 = sphi 0, %s88
      %s91 = sphi 0, %s90
      %s105 = sphi 0, %s91
      %s109 = sphi 0, %s109
      %s111 = sphi 0, %s109
      %s112 = sphi 0, %s111
      %s126 = sphi 0, %s112
      %s132 = sphi 0, %s134
      %s135 = sphi 0, %s132
      %s136 = sphi 0, %s135
      %s152 = sphi 0, %s136
    $region4: #{_lambda_.1} parent=1 // loop_header_branch
      %15 = sbr.rel (%p13) target = $region8
    $region5: #{_lambda_.1} parent=1 // loop_body
      %s17 = ssub.s32 %s12, 1
      %s18 = ssub.s32 %s12, 2
      %s19 = sadd.s32 %s12, 1
      %s20 = ssub.s32 %s12, %s19
      %p21 = scmp.eq.s32.totalorder %s20, 0
      %s23 = sadd.s32 %s22, 1
      %s24 = scalar_select %p21, %s22, %s23
      %p27 = pneg %p21
      %p28 = scmp.eq.s32.totalorder %s12, 1
      %p29 = por %p27, %p28
      %p30 = scmp.ne.s32.totalorder %s22, %s25
      %p31 = scmp.eq.s32.totalorder %s12, 0
      %p32 = por %p30, %p31
      %p33 = scmp.ne.s32.totalorder %s22, %s25
      %p34 = scmp.eq.s32.totalorder %s17, 1
      %p35 = por %p33, %p34
      %p36 = scmp.ne.s32.totalorder %s25, %s26
      %p37 = scmp.eq.s32.totalorder %s17, 0
      %p38 = por %p36, %p37
      %p39 = scmp.ne.s32.totalorder %s25, %s26
      %p40 = scmp.eq.s32.totalorder %s18, 1
      %p41 = por %p39, %p40
      %p43 = scmp.ne.s32.totalorder %s26, %s42
      %p44 = scmp.eq.s32.totalorder %s18, 0
      %p45 = por %p43, %p44
      %s47 = sadd.s32 %s46, 1
      %p50 = scmp.eq.s32.totalorder %s12, 1
      %p51 = scmp.ne.s32.totalorder %s46, %s48
      %p52 = scmp.eq.s32.totalorder %s12, 0
      %p53 = por %p51, %p52
      %p54 = scmp.ne.s32.totalorder %s46, %s48
      %p55 = scmp.eq.s32.totalorder %s17, 1
      %p56 = por %p54, %p55
      %p57 = scmp.ne.s32.totalorder %s48, %s49
      %p58 = scmp.eq.s32.totalorder %s17, 0
      %p59 = por %p57, %p58
      %p60 = scmp.ne.s32.totalorder %s48, %s49
      %p61 = scmp.eq.s32.totalorder %s18, 1
      %p62 = por %p60, %p61
      %p64 = scmp.ne.s32.totalorder %s49, %s63
      %p65 = scmp.eq.s32.totalorder %s18, 0
      %p66 = por %p64, %p65
      %s68 = sadd.s32 %s67, 1
      %p71 = scmp.eq.s32.totalorder %s12, 1
      %p72 = scmp.ne.s32.totalorder %s67, %s69
      %p73 = scmp.eq.s32.totalorder %s12, 0
      %p74 = por %p72, %p73
      %p75 = scmp.ne.s32.totalorder %s67, %s69
      %p76 = scmp.eq.s32.totalorder %s17, 1
      %p77 = por %p75, %p76
      %p78 = scmp.ne.s32.totalorder %s69, %s70
      %p79 = scmp.eq.s32.totalorder %s17, 0
      %p80 = por %p78, %p79
      %p81 = scmp.ne.s32.totalorder %s69, %s70
      %p82 = scmp.eq.s32.totalorder %s18, 1
      %p83 = por %p81, %p82
      %p85 = scmp.ne.s32.totalorder %s70, %s84
      %p86 = scmp.eq.s32.totalorder %s18, 0
      %p87 = por %p85, %p86
      %s89 = sadd.s32 %s88, 1
      %p92 = scmp.eq.s32.totalorder %s12, 1
      %p93 = scmp.ne.s32.totalorder %s88, %s90
      %p94 = scmp.eq.s32.totalorder %s12, 0
      %p95 = por %p93, %p94
      %p96 = scmp.ne.s32.totalorder %s88, %s90
      %p97 = scmp.eq.s32.totalorder %s17, 1
      %p98 = por %p96, %p97
      %p99 = scmp.ne.s32.totalorder %s90, %s91
      %p100 = scmp.eq.s32.totalorder %s17, 0
      %p101 = por %p99, %p100
      %p102 = scmp.ne.s32.totalorder %s90, %s91
      %p103 = scmp.eq.s32.totalorder %s18, 1
      %p104 = por %p102, %p103
      %p106 = scmp.ne.s32.totalorder %s91, %s105
      %p107 = scmp.eq.s32.totalorder %s18, 0
      %p108 = por %p106, %p107
      %s110 = sadd.s32 %s109, 1
      %p113 = scmp.eq.s32.totalorder %s12, 1
      %p114 = scmp.ne.s32.totalorder %s109, %s111
      %p115 = scmp.eq.s32.totalorder %s12, 0
      %p116 = por %p114, %p115
      %p117 = scmp.ne.s32.totalorder %s109, %s111
      %p118 = scmp.eq.s32.totalorder %s17, 1
      %p119 = por %p117, %p118
      %p120 = scmp.ne.s32.totalorder %s111, %s112
      %p121 = scmp.eq.s32.totalorder %s17, 0
      %p122 = por %p120, %p121
      %p123 = scmp.ne.s32.totalorder %s111, %s112
      %p124 = scmp.eq.s32.totalorder %s18, 1
      %p125 = por %p123, %p124
      %p127 = scmp.ne.s32.totalorder %s112, %s126
      %p128 = scmp.eq.s32.totalorder %s18, 0
      %p129 = por %p127, %p128
      %s130 = ssub.s32 %s12, %s19
      %p131 = scmp.eq.s32.totalorder %s130, 0
      %s133 = sadd.s32 %s132, 1
      %s134 = scalar_select %p131, %s132, %s133
      %p137 = pneg %p131
      %p138 = scmp.eq.s32.totalorder %s12, 1
      %p139 = por %p137, %p138
      %p140 = scmp.ne.s32.totalorder %s132, %s135
      %p141 = scmp.eq.s32.totalorder %s12, 0
      %p142 = por %p140, %p141
      %p143 = scmp.ne.s32.totalorder %s132, %s135
      %p144 = scmp.eq.s32.totalorder %s17, 1
      %p145 = por %p143, %p144
      %p146 = scmp.ne.s32.totalorder %s135, %s136
      %p147 = scmp.eq.s32.totalorder %s17, 0
      %p148 = por %p146, %p147
      %p149 = scmp.ne.s32.totalorder %s135, %s136
      %p150 = scmp.eq.s32.totalorder %s18, 1
      %p151 = por %p149, %p150
      %p153 = scmp.ne.s32.totalorder %s136, %s152
      %p154 = scmp.eq.s32.totalorder %s18, 0
      %p155 = por %p153, %p154
      %p156 = scmp.le.s32.totalorder 1, %s12
      %p157 = scmp.lt.s32.totalorder %s12, 3
      %p158 = pnand %p156, %p157
      %p159 = pneg %p158
      // Predicated region
      $region9: #{_lambda_.1} parent=5 // pred_check
        _
      $region10: #{_lambda_.1} parent=5 // pred_check_branch
        %161 = sbr.rel (%p158) target = $region12
      $region11: #{_lambda_.1} parent=5 // pred_region
        %s162 = ssub.s32 %s12, 1
        // Predicated region
        $region13: #{_lambda_.1} parent=11 // pred_check
          %p163 = pneg %p59
        $region14: #{_lambda_.1} parent=11 // pred_check_branch
          %165 = sbr.rel (%p163) target = $region16
        $region15: #{_lambda_.1} parent=11 // pred_region
          _
        $region16: #{_lambda_.1} parent=11 // pred_fallthru
          _
        // Predicated region
        $region17: #{_lambda_.1} parent=11 // pred_check
          %p166 = pneg %p80
        $region18: #{_lambda_.1} parent=11 // pred_check_branch
          %168 = sbr.rel (%p166) target = $region20
        $region19: #{_lambda_.1} parent=11 // pred_region
          _
        $region20: #{_lambda_.1} parent=11 // pred_fallthru
          _
        // Predicated region
        $region21: #{_lambda_.1} parent=11 // pred_check
          %p169 = pneg %p101
        $region22: #{_lambda_.1} parent=11 // pred_check_branch
          %171 = sbr.rel (%p169) target = $region24
        $region23: #{_lambda_.1} parent=11 // pred_region
          %s173 = ssub.s32 21504, 21504
          %174 = vsyncadd [#allocation5], %s173
          %s175 = sshll.u32 [#allocation4], 4
          %s176 = int_to_ptr.vmem [resolvable:$true] %s175
          %181 = dma.hbm_to_vmem [thread:$0]  %s3, 21504, %s176, [#allocation5], 64, 64, 4
        $region24: #{_lambda_.1} parent=11 // pred_fallthru
          _
        // Predicated region
        $region25: #{_lambda_.1} parent=11 // pred_check
          %p182 = pneg %p122
        $region26: #{_lambda_.1} parent=11 // pred_check_branch
          %184 = sbr.rel (%p182) target = $region28
        $region27: #{_lambda_.1} parent=11 // pred_region
          _
        $region28: #{_lambda_.1} parent=11 // pred_fallthru
          _
      $region12: #{_lambda_.1} parent=5 // pred_fallthru
        _
      %p185 = scmp.lt.s32.totalorder %s12, 2
      // Predicated region
      $region29: #{_lambda_.1} parent=5 // pred_check
        %p186 = pneg %p185
      $region30: #{_lambda_.1} parent=5 // pred_check_branch
        %188 = sbr.rel (%p186) target = $region32
      $region31: #{_lambda_.1} parent=5 // pred_region
        // Predicated region
        $region33: #{_lambda_.1} parent=31 // pred_check
          %p189 = pneg %p32
        $region34: #{_lambda_.1} parent=31 // pred_check_branch
          %191 = sbr.rel (%p189) target = $region36
        $region35: #{_lambda_.1} parent=31 // pred_region
          %p192 = scmp.lt.s32.totalorder %s12, 1
          %s193 = scalar_select %p192, %s12, 1
          %s194 = smul.addr %s193, 2
          %s195 = smul.addr %s194, 8
          %s196 = scalar_lea.vmem %s0, %s195
        $region36: #{_lambda_.1} parent=31 // pred_fallthru
          _
      $region32: #{_lambda_.1} parent=5 // pred_fallthru
        _
      %p197 = scmp.le.s32.totalorder 1, %s12
      %p198 = scmp.lt.s32.totalorder %s12, 3
      %p199 = pnand %p197, %p198
      %p200 = pneg %p199
      // Predicated region
      $region37: #{_lambda_.1} parent=5 // pred_check
        _
      $region38: #{_lambda_.1} parent=5 // pred_check_branch
        %202 = sbr.rel (%p199) target = $region40
      $region39: #{_lambda_.1} parent=5 // pred_region
        %s203 = ssub.s32 %s12, 1
        // Predicated region
        $region41: #{_lambda_.1} parent=39 // pred_check
          %p204 = pneg %p101
        $region42: #{_lambda_.1} parent=39 // pred_check_branch
          %206 = sbr.rel (%p204) target = $region44
        $region43: #{_lambda_.1} parent=39 // pred_region
          %207 = dma.done [#allocation5], 21504
        $region44: #{_lambda_.1} parent=39 // pred_fallthru
          _
        %p208 = scmp.lt.s32.totalorder %s17, 1
        %s209 = scalar_select %p208, %s17, 1
        %s210 = smul.addr %s209, 2
        %s211 = smul.addr %s210, 8
        %s212 = scalar_lea.vmem %s0, %s211
        %p213 = pneg %p38
        %p214 = pneg %p35
        %p215 = pneg %p59
        %p216 = pneg %p56
        %p217 = pneg %p80
        %p218 = pneg %p77
        %p219 = pneg %p101
        %p220 = pneg %p98
        %p221 = pneg %p122
        %p222 = pneg %p119
        %p223 = pneg %p148
        %p224 = pneg %p145
        %p225 = scmp.lt.s32.totalorder %s17, 1
        %s226 = scalar_select %p225, %s17, 1
        %s227 = smul.addr %s226, 2
        %s228 = smul.addr %s227, 8
        %s229 = scalar_lea.vmem %s5, %s228
        %p230 = scmp.lt.s32.totalorder %s17, 1
        %s231 = scalar_select %p230, %s17, 1
        %s232 = smul.addr %s231, 2
        %s233 = smul.addr %s232, 8
        %s234 = scalar_lea.vmem %s0, %s233
        %p235 = scmp.lt.s32.totalorder %s17, 1
        %s236 = scalar_select %p235, %s17, 1
        %s237 = smul.addr %s236, 2
        %s238 = smul.addr %s237, 8
        %s239 = scalar_lea.vmem %s5, %s238
        %241 = vst [vmem:[#allocation3] sm:$0xff] 0.0
        %242 = vst [vmem:[#allocation3 + $0x8] sm:$0xff] 0.0
        %243 = vst [vmem:[#allocation3 + $0x10] sm:$0xff] 0.0
        %244 = vst [vmem:[#allocation3 + $0x18] sm:$0xff] 0.0
        %v245 = vld [vmem:[%s234] sm:$0xff]
        %v246 = vld [vmem:[%s234 + $0x8] sm:$0xff]
        %247 = vst [vmem:[#allocation3 + $0x8] sm:$0xff] %v245
        %248 = vst [vmem:[#allocation3 + $0x10] sm:$0xff] %v246
        %v249 = vld [vmem:[#allocation3] sm:$0xff]
        %v250 = vld [vmem:[#allocation3 + $0x8] sm:$0xff]
        %v251 = vld [vmem:[#allocation3 + $0x10] sm:$0xff]
        %v252 = vld [vmem:[#allocation3 + $0x18] sm:$0xff]
        %vm255 = vcmask 1046528
        %v256 = vrot.slane %v245, 1
        %v257 = vrot.slane %v246, 1
        %v258 = vsel %vm255, %v256, %v257
        %vm265 = vcmask 1045504
        %v266 = vrot.slane %v250, 2
        %v267 = vrot.slane %v251, 2
        %v268 = vsel %vm265, %v266, %v267
        %v269 = vrot.slane %v252, 2
        %v270 = vsel %vm265, %v267, %v269
        %v274 = vld [vmem:[#allocation4] sm:$0xf]
        %v275 = vld [vmem:[#allocation4 + $0x4] sm:$0xf]
        %v276 = vld [vmem:[#allocation4 + $0x8] sm:$0xf]
        %v277 = vld [vmem:[#allocation4 + $0xc] sm:$0xf]
        %v278 = vld [vmem:[#allocation4 + $0x10] sm:$0xf]
        %v279 = vld [vmem:[#allocation4 + $0x14] sm:$0xf]
        %v280 = vld [vmem:[#allocation4 + $0x18] sm:$0xf]
        %v281 = vld [vmem:[#allocation4 + $0x1c] sm:$0xf]
        %v282 = vld [vmem:[#allocation4 + $0x20] sm:$0xf]
        %v283 = vld [vmem:[#allocation4 + $0x24] sm:$0xf]
        %v284 = vld [vmem:[#allocation4 + $0x28] sm:$0xf]
        %v285 = vld [vmem:[#allocation4 + $0x2c] sm:$0xf]
        %v286 = vld [vmem:[#allocation4 + $0x30] sm:$0xf]
        %v287 = vld [vmem:[#allocation4 + $0x34] sm:$0xf]
        %v288 = vld [vmem:[#allocation4 + $0x38] sm:$0xf]
        %v289 = vld [vmem:[#allocation4 + $0x3c] sm:$0xf]
        %v290 = vld [vmem:[#allocation4 + $0x40] sm:$0xf]
        %v291 = vld [vmem:[#allocation4 + $0x44] sm:$0xf]
        %v292 = vld [vmem:[#allocation4 + $0x48] sm:$0xf]
        %v293 = vld [vmem:[#allocation4 + $0x4c] sm:$0xf]
        %v294 = vld [vmem:[#allocation4 + $0x50] sm:$0xf]
        %v295 = vld [vmem:[#allocation4 + $0x54] sm:$0xf]
        %v296 = vld [vmem:[#allocation4 + $0x58] sm:$0xf]
        %v297 = vld [vmem:[#allocation4 + $0x5c] sm:$0xf]
        %v298 = vld [vmem:[#allocation4 + $0x60] sm:$0xf]
        %v299 = vld [vmem:[#allocation4 + $0x64] sm:$0xf]
        %v300 = vld [vmem:[#allocation4 + $0x68] sm:$0xf]
        %v301 = vld [vmem:[#allocation4 + $0x6c] sm:$0xf]
        %v302 = vld [vmem:[#allocation4 + $0x70] sm:$0xf]
        %v303 = vld [vmem:[#allocation4 + $0x74] sm:$0xf]
        %v304 = vld [vmem:[#allocation4 + $0x78] sm:$0xf]
        %v305 = vld [vmem:[#allocation4 + $0x7c] sm:$0xf]
        %v306 = vld [vmem:[#allocation4 + $0x80] sm:$0xf]
        %v307 = vld [vmem:[#allocation4 + $0x84] sm:$0xf]
        %v308 = vld [vmem:[#allocation4 + $0x88] sm:$0xf]
        %v309 = vld [vmem:[#allocation4 + $0x8c] sm:$0xf]
        %v310 = vld [vmem:[#allocation4 + $0x90] sm:$0xf]
        %v311 = vld [vmem:[#allocation4 + $0x94] sm:$0xf]
        %v312 = vld [vmem:[#allocation4 + $0x98] sm:$0xf]
        %v313 = vld [vmem:[#allocation4 + $0x9c] sm:$0xf]
        %v314 = vld [vmem:[#allocation4 + $0xa0] sm:$0xf]
        %v315 = vld [vmem:[#allocation4 + $0xa4] sm:$0xf]
        %v316 = vld [vmem:[#allocation4 + $0xa8] sm:$0xf]
        %v317 = vld [vmem:[#allocation4 + $0xac] sm:$0xf]
        %v318 = vld [vmem:[#allocation4 + $0xb0] sm:$0xf]
        %v319 = vld [vmem:[#allocation4 + $0xb4] sm:$0xf]
        %v320 = vld [vmem:[#allocation4 + $0xb8] sm:$0xf]
        %v321 = vld [vmem:[#allocation4 + $0xbc] sm:$0xf]
        %v322 = vpack.c.bf16 %v250, %v249
        %v323 = vpack.c.bf16 %v258, %v256
        %v324 = vpack.c.bf16 %v268, %v266
        %v325 = vpack.c.bf16 %v251, %v251
        %v326 = vpack.c.bf16 %v257, %v257
        %v327 = vpack.c.bf16 %v270, %v270
        %vm328 = vsmask.f32 4352
        %v330 = vshrl.u32 %v322, 16
        %v332 = vrot.slane %v330, 3
        %v333 = vshll.u32 %v322, 16
        %v335 = vrot.slane %v333, 4
        %v336 = vor.u32 %v332, %v335
        %v338 = vshrl.u32 %v325, 16
        %v340 = vrot.slane %v338, 3
        %v341 = vshll.u32 %v325, 16
        %v343 = vrot.slane %v341, 4
        %v344 = vor.u32 %v340, %v343
        %v345 = vsel %vm328, %v336, %v344
        %v347 = vshrl.u32 %v323, 16
        %v349 = vrot.slane %v347, 3
        %v350 = vshll.u32 %v323, 16
        %v352 = vrot.slane %v350, 4
        %v353 = vor.u32 %v349, %v352
        %v355 = vshrl.u32 %v326, 16
        %v357 = vrot.slane %v355, 3
        %v358 = vshll.u32 %v326, 16
        %v360 = vrot.slane %v358, 4
        %v361 = vor.u32 %v357, %v360
        %v362 = vsel %vm328, %v353, %v361
        %v364 = vshrl.u32 %v324, 16
        %v366 = vrot.slane %v364, 3
        %v367 = vshll.u32 %v324, 16
        %v369 = vrot.slane %v367, 4
        %v370 = vor.u32 %v366, %v369
        %v372 = vshrl.u32 %v327, 16
        %v374 = vrot.slane %v372, 3
        %v375 = vshll.u32 %v327, 16
        %v377 = vrot.slane %v375, 4
        %v378 = vor.u32 %v374, %v377
        %v379 = vsel %vm328, %v370, %v378
        %v431 = vunpack.c.l.b16 %v274
        %v432 = vunpack.c.l.b16 %v275
        %v433 = vunpack.c.l.b16 %v276
        %v434 = vunpack.c.l.b16 %v277
        %v435 = vunpack.c.l.b16 %v278
        %v436 = vunpack.c.l.b16 %v279
        %v437 = vunpack.c.l.b16 %v280
        %v438 = vunpack.c.l.b16 %v281
        %v439 = vunpack.c.l.b16 %v282
        %v440 = vunpack.c.l.b16 %v283
        %v441 = vunpack.c.l.b16 %v284
        %v442 = vunpack.c.l.b16 %v285
        %v443 = vunpack.c.l.b16 %v286
        %v444 = vunpack.c.l.b16 %v287
        %v445 = vunpack.c.l.b16 %v288
        %v446 = vunpack.c.l.b16 %v289
        %v447 = vunpack.c.l.b16 %v290
        %v448 = vunpack.c.l.b16 %v291
        %v449 = vunpack.c.l.b16 %v292
        %v450 = vunpack.c.l.b16 %v293
        %v451 = vunpack.c.l.b16 %v294
        %v452 = vunpack.c.l.b16 %v295
        %v453 = vunpack.c.l.b16 %v296
        %v454 = vunpack.c.l.b16 %v297
        %v455 = vunpack.c.l.b16 %v298
        %v456 = vunpack.c.l.b16 %v299
        %v457 = vunpack.c.l.b16 %v300
        %v458 = vunpack.c.l.b16 %v301
        %v459 = vunpack.c.l.b16 %v302
        %v460 = vunpack.c.l.b16 %v303
        %v461 = vunpack.c.l.b16 %v304
        %v462 = vunpack.c.l.b16 %v305
        %v463 = vunpack.c.l.b16 %v306
        %v464 = vunpack.c.l.b16 %v307
        %v465 = vunpack.c.l.b16 %v308
        %v466 = vunpack.c.l.b16 %v309
        %v467 = vunpack.c.l.b16 %v310
        %v468 = vunpack.c.l.b16 %v311
        %v469 = vunpack.c.l.b16 %v312
        %v470 = vunpack.c.l.b16 %v313
        %v471 = vunpack.c.l.b16 %v314
        %v472 = vunpack.c.l.b16 %v315
        %v473 = vunpack.c.l.b16 %v316
        %v474 = vunpack.c.l.b16 %v317
        %v475 = vunpack.c.l.b16 %v318
        %v476 = vunpack.c.l.b16 %v319
        %v477 = vunpack.c.l.b16 %v320
        %v478 = vunpack.c.l.b16 %v321
        %v479 = vpack.c.b16 %v432, %v431
        %v480 = vpack.c.b16 %v434, %v433
        %v481 = vpack.c.b16 %v436, %v435
        %v482 = vpack.c.b16 %v438, %v437
        %v483 = vpack.c.b16 %v440, %v439
        %v484 = vpack.c.b16 %v442, %v441
        %v485 = vpack.c.b16 %v444, %v443
        %v486 = vpack.c.b16 %v446, %v445
        %v487 = vpack.c.b16 %v448, %v447
        %v488 = vpack.c.b16 %v450, %v449
        %v489 = vpack.c.b16 %v452, %v451
        %v490 = vpack.c.b16 %v454, %v453
        %v491 = vpack.c.b16 %v456, %v455
        %v492 = vpack.c.b16 %v458, %v457
        %v493 = vpack.c.b16 %v460, %v459
        %v494 = vpack.c.b16 %v462, %v461
        %v495 = vpack.c.b16 %v464, %v463
        %v496 = vpack.c.b16 %v466, %v465
        %v497 = vpack.c.b16 %v468, %v467
        %v498 = vpack.c.b16 %v470, %v469
        %v499 = vpack.c.b16 %v472, %v471
        %v500 = vpack.c.b16 %v474, %v473
        %v501 = vpack.c.b16 %v476, %v475
        %v502 = vpack.c.b16 %v478, %v477
        %527 = vmatprep.subr.bf16.mxu0 0
        %528 = vmatpush1.bf16.msra.mxu0 %v479
        %529 = vmatprep.subr.bf16.mxu0 0
        %530 = vmatpush1.bf16.msra.mxu0 %v480
        %531 = vmatprep.subr.bf16.mxu0 0
        %532 = vmatpush1.bf16.msra.mxu0 %v481
        %533 = vmatprep.subr.bf16.mxu0 0
        %534 = vmatpush1.bf16.msra.mxu0 %v482
        %535 = vmatprep.subr.bf16.mxu0 0
        %536 = vmatpush1.bf16.msra.mxu0 %v483
        %537 = vmatprep.subr.bf16.mxu0 0
        %538 = vmatpush1.bf16.msra.mxu0 %v484
        %539 = vmatprep.subr.bf16.mxu0 0
        %540 = vmatpush1.bf16.msra.mxu0 %v485
        %541 = vmatprep.subr.bf16.mxu0 0
        %542 = vmatpush1.bf16.msra.mxu0 %v486
        %543 = vmatprep.subr.bf16.mxu0 0
        %544 = vmatpush1.bf16.msra.mxu0 %v487
        %545 = vmatprep.subr.bf16.mxu0 0
        %546 = vmatpush1.bf16.msra.mxu0 %v488
        %547 = vmatprep.subr.bf16.mxu0 0
        %548 = vmatpush1.bf16.msra.mxu0 %v489
        %549 = vmatprep.subr.bf16.mxu0 0
        %550 = vmatpush1.bf16.msra.mxu0 %v490
        %551 = vmatprep.subr.bf16.mxu0 0
        %552 = vmatpush1.bf16.msra.mxu0 %v491
        %553 = vmatprep.subr.bf16.mxu0 0
        %554 = vmatpush1.bf16.msra.mxu0 %v492
        %555 = vmatprep.subr.bf16.mxu0 0
        %556 = vmatpush1.bf16.msra.mxu0 %v493
        %557 = vmatprep.subr.bf16.mxu0 0
        %558 = vmatpush1.bf16.msra.mxu0 %v494
        %559 = vmatprep.mubr.bf16.mxu0 %v362
        %560 = vmatmul.mubr.bf16.gmra.mrb[0].mxu0 %v345
        %v561 = vpop.f32.mrb[0].mxu0
        %v562 = vadd.f32 0.0, %v561
        %v563 = vpop.f32.mrb[0].mxu0
        %v564 = vpop.f32.mrb[0].mxu0
        %v565 = vadd.f32 0.0, %v564
        %v566 = vpop.f32.mrb[0].mxu0
        %567 = vdwg.mxu0
        %568 = vmatprep.subr.bf16.mxu0 0
        %569 = vmatpush1.bf16.msra.mxu0 %v495
        %570 = vmatprep.subr.bf16.mxu0 0
        %571 = vmatpush1.bf16.msra.mxu0 %v496
        %572 = vmatprep.subr.bf16.mxu0 0
        %573 = vmatpush1.bf16.msra.mxu0 %v497
        %574 = vmatprep.subr.bf16.mxu0 0
        %575 = vmatpush1.bf16.msra.mxu0 %v498
        %576 = vmatprep.subr.bf16.mxu0 0
        %577 = vmatpush1.bf16.msra.mxu0 %v499
        %578 = vmatprep.subr.bf16.mxu0 0
        %579 = vmatpush1.bf16.msra.mxu0 %v500
        %580 = vmatprep.subr.bf16.mxu0 0
        %581 = vmatpush1.bf16.msra.mxu0 %v501
        %582 = vmatprep.subr.bf16.mxu0 0
        %583 = vmatpush1.bf16.msra.mxu0 %v502
        %584 = vmatprep.subr.bf16.mxu0 0
        %585 = vmatpush1.bf16.msra.mxu0 0
        %586 = vmatprep.subr.bf16.mxu0 0
        %587 = vmatpush1.bf16.msra.mxu0 0
        %588 = vmatprep.subr.bf16.mxu0 0
        %589 = vmatpush1.bf16.msra.mxu0 0
        %590 = vmatprep.subr.bf16.mxu0 0
        %591 = vmatpush1.bf16.msra.mxu0 0
        %592 = vmatprep.subr.bf16.mxu0 0
        %593 = vmatpush1.bf16.msra.mxu0 0
        %594 = vmatprep.subr.bf16.mxu0 0
        %595 = vmatpush1.bf16.msra.mxu0 0
        %596 = vmatprep.subr.bf16.mxu0 0
        %597 = vmatpush1.bf16.msra.mxu0 0
        %598 = vmatprep.subr.bf16.mxu0 0
        %599 = vmatpush1.bf16.msra.mxu0 0
        %600 = vmatprep.mubr.bf16.mxu0 0
        %601 = vmatmul.mubr.bf16.gmra.mrb[0].mxu0 %v379
        %v602 = vpop.f32.mrb[0].mxu0
        %v603 = vadd.f32 %v562, %v602
        %v604 = vpop.f32.mrb[0].mxu0
        %v605 = vpop.f32.mrb[0].mxu0
        %v606 = vadd.f32 %v565, %v605
        %v607 = vpop.f32.mrb[0].mxu0
        %608 = vdwg.mxu0
        %v609 = vld [vmem:[%s1] sm:$0x1]
        %v610 = vld [vmem:[%s2] sm:$0x1]
        %v611 = vlaneseq
        %v612 = vshrl.u32 %v611, 7
        %v613 = vsub.s32 0, %v612
        %v614 = vrot.slane %v609, %v613
        %v615 = vmul.f32 %v603, %v614
        %v616 = vmul.f32 %v606, %v614
        %v617 = vlaneseq
        %v618 = vshrl.u32 %v617, 7
        %v619 = vsub.s32 0, %v618
        %v620 = vrot.slane %v610, %v619
        %v621 = vadd.f32 %v615, %v620
        %v622 = vadd.f32 %v616, %v620
        %v623 = vmax.f32 %v621, 0.0
        %v624 = vmax.f32 %v622, 0.0
        %625 = vst [vmem:[#allocation3 + $0x8] sm:$0xff] %v623
        %626 = vst [vmem:[#allocation3 + $0x10] sm:$0xff] %v624
        %v627 = vld [vmem:[#allocation3] sm:$0xff]
        %v628 = vld [vmem:[#allocation3 + $0x8] sm:$0xff]
        %v629 = vld [vmem:[#allocation3 + $0x10] sm:$0xff]
        %v630 = vld [vmem:[#allocation3 + $0x18] sm:$0xff]
        %v633 = vrot.slane %v623, 1
        %v634 = vrot.slane %v624, 1
        %v635 = vsel %vm255, %v633, %v634
        %v639 = vmax.f32 %v627, %v633
        %v640 = vmax.f32 %v628, %v635
        %v641 = vmax.f32 %v629, %v634
        %v645 = vrot.slane %v628, 2
        %v646 = vrot.slane %v629, 2
        %v647 = vsel %vm265, %v645, %v646
        %v648 = vrot.slane %v630, 2
        %v649 = vsel %vm265, %v646, %v648
        %v653 = vmax.f32 %v639, %v645
        %v654 = vmax.f32 %v640, %v647
        %v655 = vmax.f32 %v641, %v649
        %656 = vst [vmem:[#allocation2 - $0x7] sm:$0x80] %v653
        %657 = vst [vmem:[#allocation2 + $0x1] sm:$0xff] %v654
        %658 = vst [vmem:[#allocation2 + $0x9] sm:$0x7f] %v655
        %v659 = vld [vmem:[#allocation2] sm:$0xff]
        %v660 = vld [vmem:[#allocation2 + $0x8] sm:$0xff]
        %v661 = vld [vmem:[%s1 + $0x1] sm:$0x1]
        %v662 = vld [vmem:[%s2 + $0x1] sm:$0x1]
        %v663 = vlaneseq
        %v664 = vshrl.u32 %v663, 7
        %v665 = vsub.s32 0, %v664
        %v666 = vrot.slane %v661, %v665
        %v667 = vmul.f32 %v659, %v666
        %v668 = vmul.f32 %v660, %v666
        %v669 = vlaneseq
        %v670 = vshrl.u32 %v669, 7
        %v671 = vsub.s32 0, %v670
        %v672 = vrot.slane %v662, %v671
        %v673 = vadd.f32 %v667, %v672
        %v674 = vadd.f32 %v668, %v672
        %v675 = vmax.f32 %v673, 0.0
        %v676 = vmax.f32 %v674, 0.0
        %v677 = vld [vmem:[#allocation4 + $0xc0] sm:$0xf]
        %v678 = vld [vmem:[#allocation4 + $0xc4] sm:$0xf]
        %v679 = vld [vmem:[#allocation4 + $0xc8] sm:$0xf]
        %v680 = vld [vmem:[#allocation4 + $0xcc] sm:$0xf]
        %v681 = vld [vmem:[#allocation4 + $0xd0] sm:$0xf]
        %v682 = vld [vmem:[#allocation4 + $0xd4] sm:$0xf]
        %v683 = vld [vmem:[#allocation4 + $0xd8] sm:$0xf]
        %v684 = vld [vmem:[#allocation4 + $0xdc] sm:$0xf]
        %v685 = vld [vmem:[#allocation4 + $0xe0] sm:$0xf]
        %v686 = vld [vmem:[#allocation4 + $0xe4] sm:$0xf]
        %v687 = vld [vmem:[#allocation4 + $0xe8] sm:$0xf]
        %v688 = vld [vmem:[#allocation4 + $0xec] sm:$0xf]
        %v689 = vld [vmem:[#allocation4 + $0xf0] sm:$0xf]
        %v690 = vld [vmem:[#allocation4 + $0xf4] sm:$0xf]
        %v691 = vld [vmem:[#allocation4 + $0xf8] sm:$0xf]
        %v692 = vld [vmem:[#allocation4 + $0xfc] sm:$0xf]
        %v693 = vpack.c.bf16 %v676, %v675
        %v710 = vunpack.c.l.b16 %v677
        %v711 = vunpack.c.l.b16 %v678
        %v712 = vunpack.c.l.b16 %v679
        %v713 = vunpack.c.l.b16 %v680
        %v714 = vunpack.c.l.b16 %v681
        %v715 = vunpack.c.l.b16 %v682
        %v716 = vunpack.c.l.b16 %v683
        %v717 = vunpack.c.l.b16 %v684
        %v718 = vunpack.c.l.b16 %v685
        %v719 = vunpack.c.l.b16 %v686
        %v720 = vunpack.c.l.b16 %v687
        %v721 = vunpack.c.l.b16 %v688
        %v722 = vunpack.c.l.b16 %v689
        %v723 = vunpack.c.l.b16 %v690
        %v724 = vunpack.c.l.b16 %v691
        %v725 = vunpack.c.l.b16 %v692
        %v726 = vpack.c.b16 %v711, %v710
        %v727 = vpack.c.b16 %v713, %v712
        %v728 = vpack.c.b16 %v715, %v714
        %v729 = vpack.c.b16 %v717, %v716
        %v730 = vpack.c.b16 %v719, %v718
        %v731 = vpack.c.b16 %v721, %v720
        %v732 = vpack.c.b16 %v723, %v722
        %v733 = vpack.c.b16 %v725, %v724
        %742 = vmatprep.subr.bf16.mxu0 0
        %743 = vmatpush1.bf16.msra.mxu0 %v726
        %744 = vmatprep.subr.bf16.mxu0 0
        %745 = vmatpush1.bf16.msra.mxu0 %v727
        %746 = vmatprep.subr.bf16.mxu0 0
        %747 = vmatpush1.bf16.msra.mxu0 %v728
        %748 = vmatprep.subr.bf16.mxu0 0
        %749 = vmatpush1.bf16.msra.mxu0 %v729
        %750 = vmatprep.subr.bf16.mxu0 0
        %751 = vmatpush1.bf16.msra.mxu0 %v730
        %752 = vmatprep.subr.bf16.mxu0 0
        %753 = vmatpush1.bf16.msra.mxu0 %v731
        %754 = vmatprep.subr.bf16.mxu0 0
        %755 = vmatpush1.bf16.msra.mxu0 %v732
        %756 = vmatprep.subr.bf16.mxu0 0
        %757 = vmatpush1.bf16.msra.mxu0 %v733
        %758 = vmatprep.subr.bf16.mxu0 0
        %759 = vmatpush1.bf16.msra.mxu0 0
        %760 = vmatprep.subr.bf16.mxu0 0
        %761 = vmatpush1.bf16.msra.mxu0 0
        %762 = vmatprep.subr.bf16.mxu0 0
        %763 = vmatpush1.bf16.msra.mxu0 0
        %764 = vmatprep.subr.bf16.mxu0 0
        %765 = vmatpush1.bf16.msra.mxu0 0
        %766 = vmatprep.subr.bf16.mxu0 0
        %767 = vmatpush1.bf16.msra.mxu0 0
        %768 = vmatprep.subr.bf16.mxu0 0
        %769 = vmatpush1.bf16.msra.mxu0 0
        %770 = vmatprep.subr.bf16.mxu0 0
        %771 = vmatpush1.bf16.msra.mxu0 0
        %772 = vmatprep.subr.bf16.mxu0 0
        %773 = vmatpush1.bf16.msra.mxu0 0
        %774 = vmatprep.mubr.bf16.mxu0 0
        %775 = vmatmul.mubr.bf16.gmra.mrb[0].mxu0 %v693
        %v776 = vpop.f32.mrb[0].mxu0
        %v777 = vadd.f32 0.0, %v776
        %v778 = vpop.f32.mrb[0].mxu0
        %v779 = vpop.f32.mrb[0].mxu0
        %v780 = vadd.f32 0.0, %v779
        %v781 = vpop.f32.mrb[0].mxu0
        %782 = vdwg.mxu0
        %v783 = vld [vmem:[%s1 + $0x2] sm:$0x1]
        %v784 = vld [vmem:[%s2 + $0x2] sm:$0x1]
        %v785 = vlaneseq
        %v786 = vshrl.u32 %v785, 7
        %v787 = vsub.s32 0, %v786
        %v788 = vrot.slane %v783, %v787
        %v789 = vmul.f32 %v777, %v788
        %v790 = vmul.f32 %v780, %v788
        %v791 = vlaneseq
        %v792 = vshrl.u32 %v791, 7
        %v793 = vsub.s32 0, %v792
        %v794 = vrot.slane %v784, %v793
        %v795 = vadd.f32 %v789, %v794
        %v796 = vadd.f32 %v790, %v794
        %v797 = vmax.f32 %v795, 0.0
        %v798 = vmax.f32 %v796, 0.0
        %799 = vst [vmem:[#allocation3 + $0x8] sm:$0xff] %v797
        %800 = vst [vmem:[#allocation3 + $0x10] sm:$0xff] %v798
        %v801 = vld [vmem:[#allocation3] sm:$0xff]
        %v802 = vld [vmem:[#allocation3 + $0x8] sm:$0xff]
        %v803 = vld [vmem:[#allocation3 + $0x10] sm:$0xff]
        %v804 = vld [vmem:[#allocation3 + $0x18] sm:$0xff]
        %v807 = vrot.slane %v797, 1
        %v808 = vrot.slane %v798, 1
        %v809 = vsel %vm255, %v807, %v808
        %v816 = vrot.slane %v802, 2
        %v817 = vrot.slane %v803, 2
        %v818 = vsel %vm265, %v816, %v817
        %v819 = vrot.slane %v804, 2
        %v820 = vsel %vm265, %v817, %v819
        %v824 = vld [vmem:[#allocation4 + $0x100] sm:$0xf]
        %v825 = vld [vmem:[#allocation4 + $0x104] sm:$0xf]
        %v826 = vld [vmem:[#allocation4 + $0x108] sm:$0xf]
        %v827 = vld [vmem:[#allocation4 + $0x10c] sm:$0xf]
        %v828 = vld [vmem:[#allocation4 + $0x110] sm:$0xf]
        %v829 = vld [vmem:[#allocation4 + $0x114] sm:$0xf]
        %v830 = vld [vmem:[#allocation4 + $0x118] sm:$0xf]
        %v831 = vld [vmem:[#allocation4 + $0x11c] sm:$0xf]
        %v832 = vld [vmem:[#allocation4 + $0x120] sm:$0xf]
        %v833 = vld [vmem:[#allocation4 + $0x124] sm:$0xf]
        %v834 = vld [vmem:[#allocation4 + $0x128] sm:$0xf]
        %v835 = vld [vmem:[#allocation4 + $0x12c] sm:$0xf]
        %v836 = vld [vmem:[#allocation4 + $0x130] sm:$0xf]
        %v837 = vld [vmem:[#allocation4 + $0x134] sm:$0xf]
        %v838 = vld [vmem:[#allocation4 + $0x138] sm:$0xf]
        %v839 = vld [vmem:[#allocation4 + $0x13c] sm:$0xf]
        %v840 = vld [vmem:[#allocation4 + $0x140] sm:$0xf]
        %v841 = vld [vmem:[#allocation4 + $0x144] sm:$0xf]
        %v842 = vld [vmem:[#allocation4 + $0x148] sm:$0xf]
        %v843 = vld [vmem:[#allocation4 + $0x14c] sm:$0xf]
        %v844 = vld [vmem:[#allocation4 + $0x150] sm:$0xf]
        %v845 = vld [vmem:[#allocation4 + $0x154] sm:$0xf]
        %v846 = vld [vmem:[#allocation4 + $0x158] sm:$0xf]
        %v847 = vld [vmem:[#allocation4 + $0x15c] sm:$0xf]
        %v848 = vld [vmem:[#allocation4 + $0x160] sm:$0xf]
        %v849 = vld [vmem:[#allocation4 + $0x164] sm:$0xf]
        %v850 = vld [vmem:[#allocation4 + $0x168] sm:$0xf]
        %v851 = vld [vmem:[#allocation4 + $0x16c] sm:$0xf]
        %v852 = vld [vmem:[#allocation4 + $0x170] sm:$0xf]
        %v853 = vld [vmem:[#allocation4 + $0x174] sm:$0xf]
        %v854 = vld [vmem:[#allocation4 + $0x178] sm:$0xf]
        %v855 = vld [vmem:[#allocation4 + $0x17c] sm:$0xf]
        %v856 = vld [vmem:[#allocation4 + $0x180] sm:$0xf]
        %v857 = vld [vmem:[#allocation4 + $0x184] sm:$0xf]
        %v858 = vld [vmem:[#allocation4 + $0x188] sm:$0xf]
        %v859 = vld [vmem:[#allocation4 + $0x18c] sm:$0xf]
        %v860 = vld [vmem:[#allocation4 + $0x190] sm:$0xf]
        %v861 = vld [vmem:[#allocation4 + $0x194] sm:$0xf]
        %v862 = vld [vmem:[#allocation4 + $0x198] sm:$0xf]
        %v863 = vld [vmem:[#allocation4 + $0x19c] sm:$0xf]
        %v864 = vld [vmem:[#allocation4 + $0x1a0] sm:$0xf]
        %v865 = vld [vmem:[#allocation4 + $0x1a4] sm:$0xf]
        %v866 = vld [vmem:[#allocation4 + $0x1a8] sm:$0xf]
        %v867 = vld [vmem:[#allocation4 + $0x1ac] sm:$0xf]
        %v868 = vld [vmem:[#allocation4 + $0x1b0] sm:$0xf]
        %v869 = vld [vmem:[#allocation4 + $0x1b4] sm:$0xf]
        %v870 = vld [vmem:[#allocation4 + $0x1b8] sm:$0xf]
        %v871 = vld [vmem:[#allocation4 + $0x1bc] sm:$0xf]
        %v872 = vpack.c.bf16 %v802, %v801
        %v873 = vpack.c.bf16 %v809, %v807
        %v874 = vpack.c.bf16 %v818, %v816
        %v875 = vpack.c.bf16 %v803, %v803
        %v876 = vpack.c.bf16 %v808, %v808
        %v877 = vpack.c.bf16 %v820, %v820
        %v879 = vshrl.u32 %v872, 16
        %v881 = vrot.slane %v879, 3
        %v882 = vshll.u32 %v872, 16
        %v884 = vrot.slane %v882, 4
        %v885 = vor.u32 %v881, %v884
        %v887 = vshrl.u32 %v875, 16
        %v889 = vrot.slane %v887, 3
        %v890 = vshll.u32 %v875, 16
        %v892 = vrot.slane %v890, 4
        %v893 = vor.u32 %v889, %v892
        %v894 = vsel %vm328, %v885, %v893
        %v896 = vshrl.u32 %v873, 16
        %v898 = vrot.slane %v896, 3
        %v899 = vshll.u32 %v873, 16
        %v901 = vrot.slane %v899, 4
        %v902 = vor.u32 %v898, %v901
        %v904 = vshrl.u32 %v876, 16
        %v906 = vrot.slane %v904, 3
        %v907 = vshll.u32 %v876, 16
        %v909 = vrot.slane %v907, 4
        %v910 = vor.u32 %v906, %v909
        %v911 = vsel %vm328, %v902, %v910
        %v913 = vshrl.u32 %v874, 16
        %v915 = vrot.slane %v913, 3
        %v916 = vshll.u32 %v874, 16
        %v918 = vrot.slane %v916, 4
        %v919 = vor.u32 %v915, %v918
        %v921 = vshrl.u32 %v877, 16
        %v923 = vrot.slane %v921, 3
        %v924 = vshll.u32 %v877, 16
        %v926 = vrot.slane %v924, 4
        %v927 = vor.u32 %v923, %v926
        %v928 = vsel %vm328, %v919, %v927
        %v980 = vunpack.c.l.b16 %v824
        %v981 = vunpack.c.l.b16 %v825
        %v982 = vunpack.c.l.b16 %v826
        %v983 = vunpack.c.l.b16 %v827
        %v984 = vunpack.c.l.b16 %v828
        %v985 = vunpack.c.l.b16 %v829
        %v986 = vunpack.c.l.b16 %v830
        %v987 = vunpack.c.l.b16 %v831
        %v988 = vunpack.c.l.b16 %v832
        %v989 = vunpack.c.l.b16 %v833
        %v990 = vunpack.c.l.b16 %v834
        %v991 = vunpack.c.l.b16 %v835
        %v992 = vunpack.c.l.b16 %v836
        %v993 = vunpack.c.l.b16 %v837
        %v994 = vunpack.c.l.b16 %v838
        %v995 = vunpack.c.l.b16 %v839
        %v996 = vunpack.c.l.b16 %v840
        %v997 = vunpack.c.l.b16 %v841
        %v998 = vunpack.c.l.b16 %v842
        %v999 = vunpack.c.l.b16 %v843
        %v1000 = vunpack.c.l.b16 %v844
        %v1001 = vunpack.c.l.b16 %v845
        %v1002 = vunpack.c.l.b16 %v846
        %v1003 = vunpack.c.l.b16 %v847
        %v1004 = vunpack.c.l.b16 %v848
        %v1005 = vunpack.c.l.b16 %v849
        %v1006 = vunpack.c.l.b16 %v850
        %v1007 = vunpack.c.l.b16 %v851
        %v1008 = vunpack.c.l.b16 %v852
        %v1009 = vunpack.c.l.b16 %v853
        %v1010 = vunpack.c.l.b16 %v854
        %v1011 = vunpack.c.l.b16 %v855
        %v1012 = vunpack.c.l.b16 %v856
        %v1013 = vunpack.c.l.b16 %v857
        %v1014 = vunpack.c.l.b16 %v858
        %v1015 = vunpack.c.l.b16 %v859
        %v1016 = vunpack.c.l.b16 %v860
        %v1017 = vunpack.c.l.b16 %v861
        %v1018 = vunpack.c.l.b16 %v862
        %v1019 = vunpack.c.l.b16 %v863
        %v1020 = vunpack.c.l.b16 %v864
        %v1021 = vunpack.c.l.b16 %v865
        %v1022 = vunpack.c.l.b16 %v866
        %v1023 = vunpack.c.l.b16 %v867
        %v1024 = vunpack.c.l.b16 %v868
        %v1025 = vunpack.c.l.b16 %v869
        %v1026 = vunpack.c.l.b16 %v870
        %v1027 = vunpack.c.l.b16 %v871
        %v1028 = vpack.c.b16 %v981, %v980
        %v1029 = vpack.c.b16 %v983, %v982
        %v1030 = vpack.c.b16 %v985, %v984
        %v1031 = vpack.c.b16 %v987, %v986
        %v1032 = vpack.c.b16 %v989, %v988
        %v1033 = vpack.c.b16 %v991, %v990
        %v1034 = vpack.c.b16 %v993, %v992
        %v1035 = vpack.c.b16 %v995, %v994
        %v1036 = vpack.c.b16 %v997, %v996
        %v1037 = vpack.c.b16 %v999, %v998
        %v1038 = vpack.c.b16 %v1001, %v1000
        %v1039 = vpack.c.b16 %v1003, %v1002
        %v1040 = vpack.c.b16 %v1005, %v1004
        %v1041 = vpack.c.b16 %v1007, %v1006
        %v1042 = vpack.c.b16 %v1009, %v1008
        %v1043 = vpack.c.b16 %v1011, %v1010
        %v1044 = vpack.c.b16 %v1013, %v1012
        %v1045 = vpack.c.b16 %v1015, %v1014
        %v1046 = vpack.c.b16 %v1017, %v1016
        %v1047 = vpack.c.b16 %v1019, %v1018
        %v1048 = vpack.c.b16 %v1021, %v1020
        %v1049 = vpack.c.b16 %v1023, %v1022
        %v1050 = vpack.c.b16 %v1025, %v1024
        %v1051 = vpack.c.b16 %v1027, %v1026
        %1076 = vmatprep.subr.bf16.mxu0 0
        %1077 = vmatpush1.bf16.msra.mxu0 %v1028
        %1078 = vmatprep.subr.bf16.mxu0 0
        %1079 = vmatpush1.bf16.msra.mxu0 %v1029
        %1080 = vmatprep.subr.bf16.mxu0 0
        %1081 = vmatpush1.bf16.msra.mxu0 %v1030
        %1082 = vmatprep.subr.bf16.mxu0 0
        %1083 = vmatpush1.bf16.msra.mxu0 %v1031
        %1084 = vmatprep.subr.bf16.mxu0 0
        %1085 = vmatpush1.bf16.msra.mxu0 %v1032
        %1086 = vmatprep.subr.bf16.mxu0 0
        %1087 = vmatpush1.bf16.msra.mxu0 %v1033
        %1088 = vmatprep.subr.bf16.mxu0 0
        %1089 = vmatpush1.bf16.msra.mxu0 %v1034
        %1090 = vmatprep.subr.bf16.mxu0 0
        %1091 = vmatpush1.bf16.msra.mxu0 %v1035
        %1092 = vmatprep.subr.bf16.mxu0 0
        %1093 = vmatpush1.bf16.msra.mxu0 %v1036
        %1094 = vmatprep.subr.bf16.mxu0 0
        %1095 = vmatpush1.bf16.msra.mxu0 %v1037
        %1096 = vmatprep.subr.bf16.mxu0 0
        %1097 = vmatpush1.bf16.msra.mxu0 %v1038
        %1098 = vmatprep.subr.bf16.mxu0 0
        %1099 = vmatpush1.bf16.msra.mxu0 %v1039
        %1100 = vmatprep.subr.bf16.mxu0 0
        %1101 = vmatpush1.bf16.msra.mxu0 %v1040
        %1102 = vmatprep.subr.bf16.mxu0 0
        %1103 = vmatpush1.bf16.msra.mxu0 %v1041
        %1104 = vmatprep.subr.bf16.mxu0 0
        %1105 = vmatpush1.bf16.msra.mxu0 %v1042
        %1106 = vmatprep.subr.bf16.mxu0 0
        %1107 = vmatpush1.bf16.msra.mxu0 %v1043
        %1108 = vmatprep.mubr.bf16.mxu0 %v911
        %1109 = vmatmul.mubr.bf16.gmra.mrb[0].mxu0 %v894
        %v1110 = vpop.f32.mrb[0].mxu0
        %v1111 = vadd.f32 0.0, %v1110
        %v1112 = vpop.f32.mrb[0].mxu0
        %v1113 = vpop.f32.mrb[0].mxu0
        %v1114 = vadd.f32 0.0, %v1113
        %v1115 = vpop.f32.mrb[0].mxu0
        %1116 = vdwg.mxu0
        %1117 = vmatprep.subr.bf16.mxu0 0
        %1118 = vmatpush1.bf16.msra.mxu0 %v1044
        %1119 = vmatprep.subr.bf16.mxu0 0
        %1120 = vmatpush1.bf16.msra.mxu0 %v1045
        %1121 = vmatprep.subr.bf16.mxu0 0
        %1122 = vmatpush1.bf16.msra.mxu0 %v1046
        %1123 = vmatprep.subr.bf16.mxu0 0
        %1124 = vmatpush1.bf16.msra.mxu0 %v1047
        %1125 = vmatprep.subr.bf16.mxu0 0
        %1126 = vmatpush1.bf16.msra.mxu0 %v1048
        %1127 = vmatprep.subr.bf16.mxu0 0
        %1128 = vmatpush1.bf16.msra.mxu0 %v1049
        %1129 = vmatprep.subr.bf16.mxu0 0
        %1130 = vmatpush1.bf16.msra.mxu0 %v1050
        %1131 = vmatprep.subr.bf16.mxu0 0
        %1132 = vmatpush1.bf16.msra.mxu0 %v1051
        %1133 = vmatprep.subr.bf16.mxu0 0
        %1134 = vmatpush1.bf16.msra.mxu0 0
        %1135 = vmatprep.subr.bf16.mxu0 0
        %1136 = vmatpush1.bf16.msra.mxu0 0
        %1137 = vmatprep.subr.bf16.mxu0 0
        %1138 = vmatpush1.bf16.msra.mxu0 0
        %1139 = vmatprep.subr.bf16.mxu0 0
        %1140 = vmatpush1.bf16.msra.mxu0 0
        %1141 = vmatprep.subr.bf16.mxu0 0
        %1142 = vmatpush1.bf16.msra.mxu0 0
        %1143 = vmatprep.subr.bf16.mxu0 0
        %1144 = vmatpush1.bf16.msra.mxu0 0
        %1145 = vmatprep.subr.bf16.mxu0 0
        %1146 = vmatpush1.bf16.msra.mxu0 0
        %1147 = vmatprep.subr.bf16.mxu0 0
        %1148 = vmatpush1.bf16.msra.mxu0 0
        %1149 = vmatprep.mubr.bf16.mxu0 0
        %1150 = vmatmul.mubr.bf16.gmra.mrb[0].mxu0 %v928
        %v1151 = vpop.f32.mrb[0].mxu0
        %v1152 = vadd.f32 %v1111, %v1151
        %v1153 = vpop.f32.mrb[0].mxu0
        %v1154 = vpop.f32.mrb[0].mxu0
        %v1155 = vadd.f32 %v1114, %v1154
        %v1156 = vpop.f32.mrb[0].mxu0
        %1157 = vdwg.mxu0
        %v1158 = vadd.f32 %v659, %v1152
        %v1159 = vadd.f32 %v660, %v1155
        %1160 = vst [vmem:[#allocation2] sm:$0xff] %v1158
        %1161 = vst [vmem:[#allocation2 + $0x8] sm:$0xff] %v1159
        %v1162 = vld [vmem:[#allocation2] sm:$0xff]
        %v1163 = vld [vmem:[#allocation2 + $0x8] sm:$0xff]
        %v1164 = vld [vmem:[%s1 + $0x3] sm:$0x1]
        %v1165 = vld [vmem:[%s2 + $0x3] sm:$0x1]
        %v1166 = vlaneseq
        %v1167 = vshrl.u32 %v1166, 7
        %v1168 = vsub.s32 0, %v1167
        %v1169 = vrot.slane %v1164, %v1168
        %v1170 = vmul.f32 %v1162, %v1169
        %v1171 = vmul.f32 %v1163, %v1169
        %v1172 = vlaneseq
        %v1173 = vshrl.u32 %v1172, 7
        %v1174 = vsub.s32 0, %v1173
        %v1175 = vrot.slane %v1165, %v1174
        %v1176 = vadd.f32 %v1170, %v1175
        %v1177 = vadd.f32 %v1171, %v1175
        %v1178 = vmax.f32 %v1176, 0.0
        %v1179 = vmax.f32 %v1177, 0.0
        %v1180 = vld [vmem:[#allocation4 + $0x1c0] sm:$0xf]
        %v1181 = vld [vmem:[#allocation4 + $0x1c4] sm:$0xf]
        %v1182 = vld [vmem:[#allocation4 + $0x1c8] sm:$0xf]
        %v1183 = vld [vmem:[#allocation4 + $0x1cc] sm:$0xf]
        %v1184 = vld [vmem:[#allocation4 + $0x1d0] sm:$0xf]
        %v1185 = vld [vmem:[#allocation4 + $0x1d4] sm:$0xf]
        %v1186 = vld [vmem:[#allocation4 + $0x1d8] sm:$0xf]
        %v1187 = vld [vmem:[#allocation4 + $0x1dc] sm:$0xf]
        %v1188 = vld [vmem:[#allocation4 + $0x1e0] sm:$0xf]
        %v1189 = vld [vmem:[#allocation4 + $0x1e4] sm:$0xf]
        %v1190 = vld [vmem:[#allocation4 + $0x1e8] sm:$0xf]
        %v1191 = vld [vmem:[#allocation4 + $0x1ec] sm:$0xf]
        %v1192 = vld [vmem:[#allocation4 + $0x1f0] sm:$0xf]
        %v1193 = vld [vmem:[#allocation4 + $0x1f4] sm:$0xf]
        %v1194 = vld [vmem:[#allocation4 + $0x1f8] sm:$0xf]
        %v1195 = vld [vmem:[#allocation4 + $0x1fc] sm:$0xf]
        %v1196 = vpack.c.bf16 %v1179, %v1178
        %v1213 = vunpack.c.l.b16 %v1180
        %v1214 = vunpack.c.l.b16 %v1181
        %v1215 = vunpack.c.l.b16 %v1182
        %v1216 = vunpack.c.l.b16 %v1183
        %v1217 = vunpack.c.l.b16 %v1184
        %v1218 = vunpack.c.l.b16 %v1185
        %v1219 = vunpack.c.l.b16 %v1186
        %v1220 = vunpack.c.l.b16 %v1187
        %v1221 = vunpack.c.l.b16 %v1188
        %v1222 = vunpack.c.l.b16 %v1189
        %v1223 = vunpack.c.l.b16 %v1190
        %v1224 = vunpack.c.l.b16 %v1191
        %v1225 = vunpack.c.l.b16 %v1192
        %v1226 = vunpack.c.l.b16 %v1193
        %v1227 = vunpack.c.l.b16 %v1194
        %v1228 = vunpack.c.l.b16 %v1195
        %v1229 = vpack.c.b16 %v1214, %v1213
        %v1230 = vpack.c.b16 %v1216, %v1215
        %v1231 = vpack.c.b16 %v1218, %v1217
        %v1232 = vpack.c.b16 %v1220, %v1219
        %v1233 = vpack.c.b16 %v1222, %v1221
        %v1234 = vpack.c.b16 %v1224, %v1223
        %v1235 = vpack.c.b16 %v1226, %v1225
        %v1236 = vpack.c.b16 %v1228, %v1227
        %1245 = vmatprep.subr.bf16.mxu0 0
        %1246 = vmatpush1.bf16.msra.mxu0 %v1229
        %1247 = vmatprep.subr.bf16.mxu0 0
        %1248 = vmatpush1.bf16.msra.mxu0 %v1230
        %1249 = vmatprep.subr.bf16.mxu0 0
        %1250 = vmatpush1.bf16.msra.mxu0 %v1231
        %1251 = vmatprep.subr.bf16.mxu0 0
        %1252 = vmatpush1.bf16.msra.mxu0 %v1232
        %1253 = vmatprep.subr.bf16.mxu0 0
        %1254 = vmatpush1.bf16.msra.mxu0 %v1233
        %1255 = vmatprep.subr.bf16.mxu0 0
        %1256 = vmatpush1.bf16.msra.mxu0 %v1234
        %1257 = vmatprep.subr.bf16.mxu0 0
        %1258 = vmatpush1.bf16.msra.mxu0 %v1235
        %1259 = vmatprep.subr.bf16.mxu0 0
        %1260 = vmatpush1.bf16.msra.mxu0 %v1236
        %1261 = vmatprep.subr.bf16.mxu0 0
        %1262 = vmatpush1.bf16.msra.mxu0 0
        %1263 = vmatprep.subr.bf16.mxu0 0
        %1264 = vmatpush1.bf16.msra.mxu0 0
        %1265 = vmatprep.subr.bf16.mxu0 0
        %1266 = vmatpush1.bf16.msra.mxu0 0
        %1267 = vmatprep.subr.bf16.mxu0 0
        %1268 = vmatpush1.bf16.msra.mxu0 0
        %1269 = vmatprep.subr.bf16.mxu0 0
        %1270 = vmatpush1.bf16.msra.mxu0 0
        %1271 = vmatprep.subr.bf16.mxu0 0
        %1272 = vmatpush1.bf16.msra.mxu0 0
        %1273 = vmatprep.subr.bf16.mxu0 0
        %1274 = vmatpush1.bf16.msra.mxu0 0
        %1275 = vmatprep.subr.bf16.mxu0 0
        %1276 = vmatpush1.bf16.msra.mxu0 0
        %1277 = vmatprep.mubr.bf16.mxu0 0
        %1278 = vmatmul.mubr.bf16.gmra.mrb[0].mxu0 %v1196
        %v1279 = vpop.f32.mrb[0].mxu0
        %v1280 = vadd.f32 0.0, %v1279
        %v1281 = vpop.f32.mrb[0].mxu0
        %v1282 = vpop.f32.mrb[0].mxu0
        %v1283 = vadd.f32 0.0, %v1282
        %v1284 = vpop.f32.mrb[0].mxu0
        %1285 = vdwg.mxu0
        %v1286 = vld [vmem:[%s1 + $0x4] sm:$0x1]
        %v1287 = vld [vmem:[%s2 + $0x4] sm:$0x1]
        %v1288 = vlaneseq
        %v1289 = vshrl.u32 %v1288, 7
        %v1290 = vsub.s32 0, %v1289
        %v1291 = vrot.slane %v1286, %v1290
        %v1292 = vmul.f32 %v1280, %v1291
        %v1293 = vmul.f32 %v1283, %v1291
        %v1294 = vlaneseq
        %v1295 = vshrl.u32 %v1294, 7
        %v1296 = vsub.s32 0, %v1295
        %v1297 = vrot.slane %v1287, %v1296
        %v1298 = vadd.f32 %v1292, %v1297
        %v1299 = vadd.f32 %v1293, %v1297
        %v1300 = vmax.f32 %v1298, 0.0
        %v1301 = vmax.f32 %v1299, 0.0
        %1302 = vst [vmem:[#allocation3 + $0x8] sm:$0xff] %v1300
        %1303 = vst [vmem:[#allocation3 + $0x10] sm:$0xff] %v1301
        %v1304 = vld [vmem:[#allocation3] sm:$0xff]
        %v1305 = vld [vmem:[#allocation3 + $0x8] sm:$0xff]
        %v1306 = vld [vmem:[#allocation3 + $0x10] sm:$0xff]
        %v1307 = vld [vmem:[#allocation3 + $0x18] sm:$0xff]
        %v1310 = vrot.slane %v1300, 1
        %v1311 = vrot.slane %v1301, 1
        %v1312 = vsel %vm255, %v1310, %v1311
        %v1319 = vrot.slane %v1305, 2
        %v1320 = vrot.slane %v1306, 2
        %v1321 = vsel %vm265, %v1319, %v1320
        %v1322 = vrot.slane %v1307, 2
        %v1323 = vsel %vm265, %v1320, %v1322
        %v1327 = vld [vmem:[#allocation4 + $0x200] sm:$0xf]
        %v1328 = vld [vmem:[#allocation4 + $0x204] sm:$0xf]
        %v1329 = vld [vmem:[#allocation4 + $0x208] sm:$0xf]
        %v1330 = vld [vmem:[#allocation4 + $0x20c] sm:$0xf]
        %v1331 = vld [vmem:[#allocation4 + $0x210] sm:$0xf]
        %v1332 = vld [vmem:[#allocation4 + $0x214] sm:$0xf]
        %v1333 = vld [vmem:[#allocation4 + $0x218] sm:$0xf]
        %v1334 = vld [vmem:[#allocation4 + $0x21c] sm:$0xf]
        %v1335 = vld [vmem:[#allocation4 + $0x220] sm:$0xf]
        %v1336 = vld [vmem:[#allocation4 + $0x224] sm:$0xf]
        %v1337 = vld [vmem:[#allocation4 + $0x228] sm:$0xf]
        %v1338 = vld [vmem:[#allocation4 + $0x22c] sm:$0xf]
        %v1339 = vld [vmem:[#allocation4 + $0x230] sm:$0xf]
        %v1340 = vld [vmem:[#allocation4 + $0x234] sm:$0xf]
        %v1341 = vld [vmem:[#allocation4 + $0x238] sm:$0xf]
        %v1342 = vld [vmem:[#allocation4 + $0x23c] sm:$0xf]
        %v1343 = vld [vmem:[#allocation4 + $0x240] sm:$0xf]
        %v1344 = vld [vmem:[#allocation4 + $0x244] sm:$0xf]
        %v1345 = vld [vmem:[#allocation4 + $0x248] sm:$0xf]
        %v1346 = vld [vmem:[#allocation4 + $0x24c] sm:$0xf]
        %v1347 = vld [vmem:[#allocation4 + $0x250] sm:$0xf]
        %v1348 = vld [vmem:[#allocation4 + $0x254] sm:$0xf]
        %v1349 = vld [vmem:[#allocation4 + $0x258] sm:$0xf]
        %v1350 = vld [vmem:[#allocation4 + $0x25c] sm:$0xf]
        %v1351 = vld [vmem:[#allocation4 + $0x260] sm:$0xf]
        %v1352 = vld [vmem:[#allocation4 + $0x264] sm:$0xf]
        %v1353 = vld [vmem:[#allocation4 + $0x268] sm:$0xf]
        %v1354 = vld [vmem:[#allocation4 + $0x26c] sm:$0xf]
        %v1355 = vld [vmem:[#allocation4 + $0x270] sm:$0xf]
        %v1356 = vld [vmem:[#allocation4 + $0x274] sm:$0xf]
        %v1357 = vld [vmem:[#allocation4 + $0x278] sm:$0xf]
        %v1358 = vld [vmem:[#allocation4 + $0x27c] sm:$0xf]
        %v1359 = vld [vmem:[#allocation4 + $0x280] sm:$0xf]
        %v1360 = vld [vmem:[#allocation4 + $0x284] sm:$0xf]
        %v1361 = vld [vmem:[#allocation4 + $0x288] sm:$0xf]
        %v1362 = vld [vmem:[#allocation4 + $0x28c] sm:$0xf]
        %v1363 = vld [vmem:[#allocation4 + $0x290] sm:$0xf]
        %v1364 = vld [vmem:[#allocation4 + $0x294] sm:$0xf]
        %v1365 = vld [vmem:[#allocation4 + $0x298] sm:$0xf]
        %v1366 = vld [vmem:[#allocation4 + $0x29c] sm:$0xf]
        %v1367 = vld [vmem:[#allocation4 + $0x2a0] sm:$0xf]
        %v1368 = vld [vmem:[#allocation4 + $0x2a4] sm:$0xf]
        %v1369 = vld [vmem:[#allocation4 + $0x2a8] sm:$0xf]
        %v1370 = vld [vmem:[#allocation4 + $0x2ac] sm:$0xf]
        %v1371 = vld [vmem:[#allocation4 + $0x2b0] sm:$0xf]
        %v1372 = vld [vmem:[#allocation4 + $0x2b4] sm:$0xf]
        %v1373 = vld [vmem:[#allocation4 + $0x2b8] sm:$0xf]
        %v1374 = vld [vmem:[#allocation4 + $0x2bc] sm:$0xf]
        %v1375 = vpack.c.bf16 %v1305, %v1304
        %v1376 = vpack.c.bf16 %v1312, %v1310
        %v1377 = vpack.c.bf16 %v1321, %v1319
        %v1378 = vpack.c.bf16 %v1306, %v1306
        %v1379 = vpack.c.bf16 %v1311, %v1311
        %v1380 = vpack.c.bf16 %v1323, %v1323
        %v1382 = vshrl.u32 %v1375, 16
        %v1384 = vrot.slane %v1382, 3
        %v1385 = vshll.u32 %v1375, 16
        %v1387 = vrot.slane %v1385, 4
        %v1388 = vor.u32 %v1384, %v1387
        %v1390 = vshrl.u32 %v1378, 16
        %v1392 = vrot.slane %v1390, 3
        %v1393 = vshll.u32 %v1378, 16
        %v1395 = vrot.slane %v1393, 4
        %v1396 = vor.u32 %v1392, %v1395
        %v1397 = vsel %vm328, %v1388, %v1396
        %v1399 = vshrl.u32 %v1376, 16
        %v1401 = vrot.slane %v1399, 3
        %v1402 = vshll.u32 %v1376, 16
        %v1404 = vrot.slane %v1402, 4
        %v1405 = vor.u32 %v1401, %v1404
        %v1407 = vshrl.u32 %v1379, 16
        %v1409 = vrot.slane %v1407, 3
        %v1410 = vshll.u32 %v1379, 16
        %v1412 = vrot.slane %v1410, 4
        %v1413 = vor.u32 %v1409, %v1412
        %v1414 = vsel %vm328, %v1405, %v1413
        %v1416 = vshrl.u32 %v1377, 16
        %v1418 = vrot.slane %v1416, 3
        %v1419 = vshll.u32 %v1377, 16
        %v1421 = vrot.slane %v1419, 4
        %v1422 = vor.u32 %v1418, %v1421
        %v1424 = vshrl.u32 %v1380, 16
        %v1426 = vrot.slane %v1424, 3
        %v1427 = vshll.u32 %v1380, 16
        %v1429 = vrot.slane %v1427, 4
        %v1430 = vor.u32 %v1426, %v1429
        %v1431 = vsel %vm328, %v1422, %v1430
        %v1483 = vunpack.c.l.b16 %v1327
        %v1484 = vunpack.c.l.b16 %v1328
        %v1485 = vunpack.c.l.b16 %v1329
        %v1486 = vunpack.c.l.b16 %v1330
        %v1487 = vunpack.c.l.b16 %v1331
        %v1488 = vunpack.c.l.b16 %v1332
        %v1489 = vunpack.c.l.b16 %v1333
        %v1490 = vunpack.c.l.b16 %v1334
        %v1491 = vunpack.c.l.b16 %v1335
        %v1492 = vunpack.c.l.b16 %v1336
        %v1493 = vunpack.c.l.b16 %v1337
        %v1494 = vunpack.c.l.b16 %v1338
        %v1495 = vunpack.c.l.b16 %v1339
        %v1496 = vunpack.c.l.b16 %v1340
        %v1497 = vunpack.c.l.b16 %v1341
        %v1498 = vunpack.c.l.b16 %v1342
        %v1499 = vunpack.c.l.b16 %v1343
        %v1500 = vunpack.c.l.b16 %v1344
        %v1501 = vunpack.c.l.b16 %v1345
        %v1502 = vunpack.c.l.b16 %v1346
        %v1503 = vunpack.c.l.b16 %v1347
        %v1504 = vunpack.c.l.b16 %v1348
        %v1505 = vunpack.c.l.b16 %v1349
        %v1506 = vunpack.c.l.b16 %v1350
        %v1507 = vunpack.c.l.b16 %v1351
        %v1508 = vunpack.c.l.b16 %v1352
        %v1509 = vunpack.c.l.b16 %v1353
        %v1510 = vunpack.c.l.b16 %v1354
        %v1511 = vunpack.c.l.b16 %v1355
        %v1512 = vunpack.c.l.b16 %v1356
        %v1513 = vunpack.c.l.b16 %v1357
        %v1514 = vunpack.c.l.b16 %v1358
        %v1515 = vunpack.c.l.b16 %v1359
        %v1516 = vunpack.c.l.b16 %v1360
        %v1517 = vunpack.c.l.b16 %v1361
        %v1518 = vunpack.c.l.b16 %v1362
        %v1519 = vunpack.c.l.b16 %v1363
        %v1520 = vunpack.c.l.b16 %v1364
        %v1521 = vunpack.c.l.b16 %v1365
        %v1522 = vunpack.c.l.b16 %v1366
        %v1523 = vunpack.c.l.b16 %v1367
        %v1524 = vunpack.c.l.b16 %v1368
        %v1525 = vunpack.c.l.b16 %v1369
        %v1526 = vunpack.c.l.b16 %v1370
        %v1527 = vunpack.c.l.b16 %v1371
        %v1528 = vunpack.c.l.b16 %v1372
        %v1529 = vunpack.c.l.b16 %v1373
        %v1530 = vunpack.c.l.b16 %v1374
        %v1531 = vpack.c.b16 %v1484, %v1483
        %v1532 = vpack.c.b16 %v1486, %v1485
        %v1533 = vpack.c.b16 %v1488, %v1487
        %v1534 = vpack.c.b16 %v1490, %v1489
        %v1535 = vpack.c.b16 %v1492, %v1491
        %v1536 = vpack.c.b16 %v1494, %v1493
        %v1537 = vpack.c.b16 %v1496, %v1495
        %v1538 = vpack.c.b16 %v1498, %v1497
        %v1539 = vpack.c.b16 %v1500, %v1499
        %v1540 = vpack.c.b16 %v1502, %v1501
        %v1541 = vpack.c.b16 %v1504, %v1503
        %v1542 = vpack.c.b16 %v1506, %v1505
        %v1543 = vpack.c.b16 %v1508, %v1507
        %v1544 = vpack.c.b16 %v1510, %v1509
        %v1545 = vpack.c.b16 %v1512, %v1511
        %v1546 = vpack.c.b16 %v1514, %v1513
        %v1547 = vpack.c.b16 %v1516, %v1515
        %v1548 = vpack.c.b16 %v1518, %v1517
        %v1549 = vpack.c.b16 %v1520, %v1519
        %v1550 = vpack.c.b16 %v1522, %v1521
        %v1551 = vpack.c.b16 %v1524, %v1523
        %v1552 = vpack.c.b16 %v1526, %v1525
        %v1553 = vpack.c.b16 %v1528, %v1527
        %v1554 = vpack.c.b16 %v1530, %v1529
        %1579 = vmatprep.subr.bf16.mxu0 0
        %1580 = vmatpush1.bf16.msra.mxu0 %v1531
        %1581 = vmatprep.subr.bf16.mxu0 0
        %1582 = vmatpush1.bf16.msra.mxu0 %v1532
        %1583 = vmatprep.subr.bf16.mxu0 0
        %1584 = vmatpush1.bf16.msra.mxu0 %v1533
        %1585 = vmatprep.subr.bf16.mxu0 0
        %1586 = vmatpush1.bf16.msra.mxu0 %v1534
        %1587 = vmatprep.subr.bf16.mxu0 0
        %1588 = vmatpush1.bf16.msra.mxu0 %v1535
        %1589 = vmatprep.subr.bf16.mxu0 0
        %1590 = vmatpush1.bf16.msra.mxu0 %v1536
        %1591 = vmatprep.subr.bf16.mxu0 0
        %1592 = vmatpush1.bf16.msra.mxu0 %v1537
        %1593 = vmatprep.subr.bf16.mxu0 0
        %1594 = vmatpush1.bf16.msra.mxu0 %v1538
        %1595 = vmatprep.subr.bf16.mxu0 0
        %1596 = vmatpush1.bf16.msra.mxu0 %v1539
        %1597 = vmatprep.subr.bf16.mxu0 0
        %1598 = vmatpush1.bf16.msra.mxu0 %v1540
        %1599 = vmatprep.subr.bf16.mxu0 0
        %1600 = vmatpush1.bf16.msra.mxu0 %v1541
        %1601 = vmatprep.subr.bf16.mxu0 0
        %1602 = vmatpush1.bf16.msra.mxu0 %v1542
        %1603 = vmatprep.subr.bf16.mxu0 0
        %1604 = vmatpush1.bf16.msra.mxu0 %v1543
        %1605 = vmatprep.subr.bf16.mxu0 0
        %1606 = vmatpush1.bf16.msra.mxu0 %v1544
        %1607 = vmatprep.subr.bf16.mxu0 0
        %1608 = vmatpush1.bf16.msra.mxu0 %v1545
        %1609 = vmatprep.subr.bf16.mxu0 0
        %1610 = vmatpush1.bf16.msra.mxu0 %v1546
        %1611 = vmatprep.mubr.bf16.mxu0 %v1414
        %1612 = vmatmul.mubr.bf16.gmra.mrb[0].mxu0 %v1397
        %v1613 = vpop.f32.mrb[0].mxu0
        %v1614 = vadd.f32 0.0, %v1613
        %v1615 = vpop.f32.mrb[0].mxu0
        %v1616 = vpop.f32.mrb[0].mxu0
        %v1617 = vadd.f32 0.0, %v1616
        %v1618 = vpop.f32.mrb[0].mxu0
        %1619 = vdwg.mxu0
        %1620 = vmatprep.subr.bf16.mxu0 0
        %1621 = vmatpush1.bf16.msra.mxu0 %v1547
        %1622 = vmatprep.subr.bf16.mxu0 0
        %1623 = vmatpush1.bf16.msra.mxu0 %v1548
        %1624 = vmatprep.subr.bf16.mxu0 0
        %1625 = vmatpush1.bf16.msra.mxu0 %v1549
        %1626 = vmatprep.subr.bf16.mxu0 0
        %1627 = vmatpush1.bf16.msra.mxu0 %v1550
        %1628 = vmatprep.subr.bf16.mxu0 0
        %1629 = vmatpush1.bf16.msra.mxu0 %v1551
        %1630 = vmatprep.subr.bf16.mxu0 0
        %1631 = vmatpush1.bf16.msra.mxu0 %v1552
        %1632 = vmatprep.subr.bf16.mxu0 0
        %1633 = vmatpush1.bf16.msra.mxu0 %v1553
        %1634 = vmatprep.subr.bf16.mxu0 0
        %1635 = vmatpush1.bf16.msra.mxu0 %v1554
        %1636 = vmatprep.subr.bf16.mxu0 0
        %1637 = vmatpush1.bf16.msra.mxu0 0
        %1638 = vmatprep.subr.bf16.mxu0 0
        %1639 = vmatpush1.bf16.msra.mxu0 0
        %1640 = vmatprep.subr.bf16.mxu0 0
        %1641 = vmatpush1.bf16.msra.mxu0 0
        %1642 = vmatprep.subr.bf16.mxu0 0
        %1643 = vmatpush1.bf16.msra.mxu0 0
        %1644 = vmatprep.subr.bf16.mxu0 0
        %1645 = vmatpush1.bf16.msra.mxu0 0
        %1646 = vmatprep.subr.bf16.mxu0 0
        %1647 = vmatpush1.bf16.msra.mxu0 0
        %1648 = vmatprep.subr.bf16.mxu0 0
        %1649 = vmatpush1.bf16.msra.mxu0 0
        %1650 = vmatprep.subr.bf16.mxu0 0
        %1651 = vmatpush1.bf16.msra.mxu0 0
        %1652 = vmatprep.mubr.bf16.mxu0 0
        %1653 = vmatmul.mubr.bf16.gmra.mrb[0].mxu0 %v1431
        %v1654 = vpop.f32.mrb[0].mxu0
        %v1655 = vadd.f32 %v1614, %v1654
        %v1656 = vpop.f32.mrb[0].mxu0
        %v1657 = vpop.f32.mrb[0].mxu0
        %v1658 = vadd.f32 %v1617, %v1657
        %v1659 = vpop.f32.mrb[0].mxu0
        %1660 = vdwg.mxu0
        %v1661 = vadd.f32 %v1162, %v1655
        %v1662 = vadd.f32 %v1163, %v1658
        %1663 = vst [vmem:[#allocation2] sm:$0xff] %v1661
        %1664 = vst [vmem:[#allocation2 + $0x8] sm:$0xff] %v1662
        %v1665 = vld [vmem:[#allocation2] sm:$0xff]
        %v1666 = vld [vmem:[#allocation2 + $0x8] sm:$0xff]
        %v1667 = vld [vmem:[%s1 + $0x5] sm:$0x1]
        %v1668 = vld [vmem:[%s2 + $0x5] sm:$0x1]
        %v1669 = vlaneseq
        %v1670 = vshrl.u32 %v1669, 7
        %v1671 = vsub.s32 0, %v1670
        %v1672 = vrot.slane %v1667, %v1671
        %v1673 = vmul.f32 %v1665, %v1672
        %v1674 = vmul.f32 %v1666, %v1672
        %v1675 = vlaneseq
        %v1676 = vshrl.u32 %v1675, 7
        %v1677 = vsub.s32 0, %v1676
        %v1678 = vrot.slane %v1668, %v1677
        %v1679 = vadd.f32 %v1673, %v1678
        %v1680 = vadd.f32 %v1674, %v1678
        %v1681 = vmax.f32 %v1679, 0.0
        %v1682 = vmax.f32 %v1680, 0.0
        %v1683 = vld [vmem:[#allocation4 + $0x2c0] sm:$0xf]
        %v1684 = vld [vmem:[#allocation4 + $0x2c4] sm:$0xf]
        %v1685 = vld [vmem:[#allocation4 + $0x2c8] sm:$0xf]
        %v1686 = vld [vmem:[#allocation4 + $0x2cc] sm:$0xf]
        %v1687 = vld [vmem:[#allocation4 + $0x2d0] sm:$0xf]
        %v1688 = vld [vmem:[#allocation4 + $0x2d4] sm:$0xf]
        %v1689 = vld [vmem:[#allocation4 + $0x2d8] sm:$0xf]
        %v1690 = vld [vmem:[#allocation4 + $0x2dc] sm:$0xf]
        %v1691 = vld [vmem:[#allocation4 + $0x2e0] sm:$0xf]
        %v1692 = vld [vmem:[#allocation4 + $0x2e4] sm:$0xf]
        %v1693 = vld [vmem:[#allocation4 + $0x2e8] sm:$0xf]
        %v1694 = vld [vmem:[#allocation4 + $0x2ec] sm:$0xf]
        %v1695 = vld [vmem:[#allocation4 + $0x2f0] sm:$0xf]
        %v1696 = vld [vmem:[#allocation4 + $0x2f4] sm:$0xf]
        %v1697 = vld [vmem:[#allocation4 + $0x2f8] sm:$0xf]
        %v1698 = vld [vmem:[#allocation4 + $0x2fc] sm:$0xf]
        %v1699 = vpack.c.bf16 %v1682, %v1681
        %v1716 = vunpack.c.l.b16 %v1683
        %v1717 = vunpack.c.l.b16 %v1684
        %v1718 = vunpack.c.l.b16 %v1685
        %v1719 = vunpack.c.l.b16 %v1686
        %v1720 = vunpack.c.l.b16 %v1687
        %v1721 = vunpack.c.l.b16 %v1688
        %v1722 = vunpack.c.l.b16 %v1689
        %v1723 = vunpack.c.l.b16 %v1690
        %v1724 = vunpack.c.l.b16 %v1691
        %v1725 = vunpack.c.l.b16 %v1692
        %v1726 = vunpack.c.l.b16 %v1693
        %v1727 = vunpack.c.l.b16 %v1694
        %v1728 = vunpack.c.l.b16 %v1695
        %v1729 = vunpack.c.l.b16 %v1696
        %v1730 = vunpack.c.l.b16 %v1697
        %v1731 = vunpack.c.l.b16 %v1698
        %v1732 = vpack.c.b16 %v1717, %v1716
        %v1733 = vpack.c.b16 %v1719, %v1718
        %v1734 = vpack.c.b16 %v1721, %v1720
        %v1735 = vpack.c.b16 %v1723, %v1722
        %v1736 = vpack.c.b16 %v1725, %v1724
        %v1737 = vpack.c.b16 %v1727, %v1726
        %v1738 = vpack.c.b16 %v1729, %v1728
        %v1739 = vpack.c.b16 %v1731, %v1730
        %1748 = vmatprep.subr.bf16.mxu0 0
        %1749 = vmatpush1.bf16.msra.mxu0 %v1732
        %1750 = vmatprep.subr.bf16.mxu0 0
        %1751 = vmatpush1.bf16.msra.mxu0 %v1733
        %1752 = vmatprep.subr.bf16.mxu0 0
        %1753 = vmatpush1.bf16.msra.mxu0 %v1734
        %1754 = vmatprep.subr.bf16.mxu0 0
        %1755 = vmatpush1.bf16.msra.mxu0 %v1735
        %1756 = vmatprep.subr.bf16.mxu0 0
        %1757 = vmatpush1.bf16.msra.mxu0 %v1736
        %1758 = vmatprep.subr.bf16.mxu0 0
        %1759 = vmatpush1.bf16.msra.mxu0 %v1737
        %1760 = vmatprep.subr.bf16.mxu0 0
        %1761 = vmatpush1.bf16.msra.mxu0 %v1738
        %1762 = vmatprep.subr.bf16.mxu0 0
        %1763 = vmatpush1.bf16.msra.mxu0 %v1739
        %1764 = vmatprep.subr.bf16.mxu0 0
        %1765 = vmatpush1.bf16.msra.mxu0 0
        %1766 = vmatprep.subr.bf16.mxu0 0
        %1767 = vmatpush1.bf16.msra.mxu0 0
        %1768 = vmatprep.subr.bf16.mxu0 0
        %1769 = vmatpush1.bf16.msra.mxu0 0
        %1770 = vmatprep.subr.bf16.mxu0 0
        %1771 = vmatpush1.bf16.msra.mxu0 0
        %1772 = vmatprep.subr.bf16.mxu0 0
        %1773 = vmatpush1.bf16.msra.mxu0 0
        %1774 = vmatprep.subr.bf16.mxu0 0
        %1775 = vmatpush1.bf16.msra.mxu0 0
        %1776 = vmatprep.subr.bf16.mxu0 0
        %1777 = vmatpush1.bf16.msra.mxu0 0
        %1778 = vmatprep.subr.bf16.mxu0 0
        %1779 = vmatpush1.bf16.msra.mxu0 0
        %1780 = vmatprep.mubr.bf16.mxu0 0
        %1781 = vmatmul.mubr.bf16.gmra.mrb[0].mxu0 %v1699
        %v1782 = vpop.f32.mrb[0].mxu0
        %v1783 = vadd.f32 0.0, %v1782
        %v1784 = vpop.f32.mrb[0].mxu0
        %v1785 = vpop.f32.mrb[0].mxu0
        %v1786 = vadd.f32 0.0, %v1785
        %v1787 = vpop.f32.mrb[0].mxu0
        %1788 = vdwg.mxu0
        %1789 = vst [vmem:[#allocation3 + $0x8] sm:$0xff] %v1783
        %1790 = vst [vmem:[#allocation3 + $0x10] sm:$0xff] %v1786
        %v1791 = vld [vmem:[#allocation3] sm:$0xff]
        %v1792 = vld [vmem:[#allocation3 + $0x8] sm:$0xff]
        %v1793 = vld [vmem:[#allocation3 + $0x10] sm:$0xff]
        %v1794 = vld [vmem:[#allocation3 + $0x18] sm:$0xff]
        %v1797 = vrot.slane %v1783, 1
        %v1798 = vrot.slane %v1786, 1
        %v1799 = vsel %vm255, %v1797, %v1798
        %v1803 = vadd.f32 %v1791, %v1797
        %v1804 = vadd.f32 %v1792, %v1799
        %v1805 = vadd.f32 %v1793, %v1798
        %v1809 = vrot.slane %v1792, 2
        %v1810 = vrot.slane %v1793, 2
        %v1811 = vsel %vm265, %v1809, %v1810
        %v1812 = vrot.slane %v1794, 2
        %v1813 = vsel %vm265, %v1810, %v1812
        %v1817 = vadd.f32 %v1803, %v1809
        %v1818 = vadd.f32 %v1804, %v1811
        %v1819 = vadd.f32 %v1805, %v1813
        %v1820 = vmul.f32 %v1817, 0.33333334
        %v1821 = vmul.f32 %v1818, 0.33333334
        %v1822 = vmul.f32 %v1819, 0.33333334
        %1823 = vst [vmem:[#allocation2 - $0x7] sm:$0x80] %v1820
        %1824 = vst [vmem:[#allocation2 + $0x1] sm:$0xff] %v1821
        %1825 = vst [vmem:[#allocation2 + $0x9] sm:$0x7f] %v1822
        %v1826 = vld [vmem:[#allocation2] sm:$0xff]
        %v1827 = vld [vmem:[#allocation2 + $0x8] sm:$0xff]
        %v1828 = vld [vmem:[%s1 + $0x6] sm:$0x1]
        %v1829 = vld [vmem:[%s2 + $0x6] sm:$0x1]
        %v1830 = vlaneseq
        %v1831 = vshrl.u32 %v1830, 7
        %v1832 = vsub.s32 0, %v1831
        %v1833 = vrot.slane %v1828, %v1832
        %v1834 = vmul.f32 %v1826, %v1833
        %v1835 = vmul.f32 %v1827, %v1833
        %v1836 = vlaneseq
        %v1837 = vshrl.u32 %v1836, 7
        %v1838 = vsub.s32 0, %v1837
        %v1839 = vrot.slane %v1829, %v1838
        %v1840 = vadd.f32 %v1834, %v1839
        %v1841 = vadd.f32 %v1835, %v1839
        %v1842 = vmax.f32 %v1840, 0.0
        %v1843 = vmax.f32 %v1841, 0.0
        %v1844 = vld [vmem:[#allocation4 + $0x300] sm:$0xf]
        %v1845 = vld [vmem:[#allocation4 + $0x304] sm:$0xf]
        %v1846 = vld [vmem:[#allocation4 + $0x308] sm:$0xf]
        %v1847 = vld [vmem:[#allocation4 + $0x30c] sm:$0xf]
        %v1848 = vld [vmem:[#allocation4 + $0x310] sm:$0xf]
        %v1849 = vld [vmem:[#allocation4 + $0x314] sm:$0xf]
        %v1850 = vld [vmem:[#allocation4 + $0x318] sm:$0xf]
        %v1851 = vld [vmem:[#allocation4 + $0x31c] sm:$0xf]
        %v1852 = vld [vmem:[#allocation4 + $0x320] sm:$0xf]
        %v1853 = vld [vmem:[#allocation4 + $0x324] sm:$0xf]
        %v1854 = vld [vmem:[#allocation4 + $0x328] sm:$0xf]
        %v1855 = vld [vmem:[#allocation4 + $0x32c] sm:$0xf]
        %v1856 = vld [vmem:[#allocation4 + $0x330] sm:$0xf]
        %v1857 = vld [vmem:[#allocation4 + $0x334] sm:$0xf]
        %v1858 = vld [vmem:[#allocation4 + $0x338] sm:$0xf]
        %v1859 = vld [vmem:[#allocation4 + $0x33c] sm:$0xf]
        %v1860 = vpack.c.bf16 %v1843, %v1842
        %v1877 = vunpack.c.l.b16 %v1844
        %v1878 = vunpack.c.l.b16 %v1845
        %v1879 = vunpack.c.l.b16 %v1846
        %v1880 = vunpack.c.l.b16 %v1847
        %v1881 = vunpack.c.l.b16 %v1848
        %v1882 = vunpack.c.l.b16 %v1849
        %v1883 = vunpack.c.l.b16 %v1850
        %v1884 = vunpack.c.l.b16 %v1851
        %v1885 = vunpack.c.l.b16 %v1852
        %v1886 = vunpack.c.l.b16 %v1853
        %v1887 = vunpack.c.l.b16 %v1854
        %v1888 = vunpack.c.l.b16 %v1855
        %v1889 = vunpack.c.l.b16 %v1856
        %v1890 = vunpack.c.l.b16 %v1857
        %v1891 = vunpack.c.l.b16 %v1858
        %v1892 = vunpack.c.l.b16 %v1859
        %v1893 = vpack.c.b16 %v1878, %v1877
        %v1894 = vpack.c.b16 %v1880, %v1879
        %v1895 = vpack.c.b16 %v1882, %v1881
        %v1896 = vpack.c.b16 %v1884, %v1883
        %v1897 = vpack.c.b16 %v1886, %v1885
        %v1898 = vpack.c.b16 %v1888, %v1887
        %v1899 = vpack.c.b16 %v1890, %v1889
        %v1900 = vpack.c.b16 %v1892, %v1891
        %1909 = vmatprep.subr.bf16.mxu0 0
        %1910 = vmatpush1.bf16.msra.mxu0 %v1893
        %1911 = vmatprep.subr.bf16.mxu0 0
        %1912 = vmatpush1.bf16.msra.mxu0 %v1894
        %1913 = vmatprep.subr.bf16.mxu0 0
        %1914 = vmatpush1.bf16.msra.mxu0 %v1895
        %1915 = vmatprep.subr.bf16.mxu0 0
        %1916 = vmatpush1.bf16.msra.mxu0 %v1896
        %1917 = vmatprep.subr.bf16.mxu0 0
        %1918 = vmatpush1.bf16.msra.mxu0 %v1897
        %1919 = vmatprep.subr.bf16.mxu0 0
        %1920 = vmatpush1.bf16.msra.mxu0 %v1898
        %1921 = vmatprep.subr.bf16.mxu0 0
        %1922 = vmatpush1.bf16.msra.mxu0 %v1899
        %1923 = vmatprep.subr.bf16.mxu0 0
        %1924 = vmatpush1.bf16.msra.mxu0 %v1900
        %1925 = vmatprep.subr.bf16.mxu0 0
        %1926 = vmatpush1.bf16.msra.mxu0 0
        %1927 = vmatprep.subr.bf16.mxu0 0
        %1928 = vmatpush1.bf16.msra.mxu0 0
        %1929 = vmatprep.subr.bf16.mxu0 0
        %1930 = vmatpush1.bf16.msra.mxu0 0
        %1931 = vmatprep.subr.bf16.mxu0 0
        %1932 = vmatpush1.bf16.msra.mxu0 0
        %1933 = vmatprep.subr.bf16.mxu0 0
        %1934 = vmatpush1.bf16.msra.mxu0 0
        %1935 = vmatprep.subr.bf16.mxu0 0
        %1936 = vmatpush1.bf16.msra.mxu0 0
        %1937 = vmatprep.subr.bf16.mxu0 0
        %1938 = vmatpush1.bf16.msra.mxu0 0
        %1939 = vmatprep.subr.bf16.mxu0 0
        %1940 = vmatpush1.bf16.msra.mxu0 0
        %1941 = vmatprep.mubr.bf16.mxu0 0
        %1942 = vmatmul.mubr.bf16.gmra.mrb[0].mxu0 %v1860
        %v1943 = vpop.f32.mrb[0].mxu0
        %v1944 = vadd.f32 0.0, %v1943
        %v1945 = vpop.f32.mrb[0].mxu0
        %v1946 = vpop.f32.mrb[0].mxu0
        %v1947 = vadd.f32 0.0, %v1946
        %v1948 = vpop.f32.mrb[0].mxu0
        %1949 = vdwg.mxu0
        %v1950 = vld [vmem:[%s1 + $0x7] sm:$0x1]
        %v1951 = vld [vmem:[%s2 + $0x7] sm:$0x1]
        %v1952 = vlaneseq
        %v1953 = vshrl.u32 %v1952, 7
        %v1954 = vsub.s32 0, %v1953
        %v1955 = vrot.slane %v1950, %v1954
        %v1956 = vmul.f32 %v1944, %v1955
        %v1957 = vmul.f32 %v1947, %v1955
        %v1958 = vlaneseq
        %v1959 = vshrl.u32 %v1958, 7
        %v1960 = vsub.s32 0, %v1959
        %v1961 = vrot.slane %v1951, %v1960
        %v1962 = vadd.f32 %v1956, %v1961
        %v1963 = vadd.f32 %v1957, %v1961
        %v1964 = vmax.f32 %v1962, 0.0
        %v1965 = vmax.f32 %v1963, 0.0
        %1966 = vst [vmem:[#allocation3 + $0x8] sm:$0xff] %v1964
        %1967 = vst [vmem:[#allocation3 + $0x10] sm:$0xff] %v1965
        %v1968 = vld [vmem:[#allocation3] sm:$0xff]
        %v1969 = vld [vmem:[#allocation3 + $0x8] sm:$0xff]
        %v1970 = vld [vmem:[#allocation3 + $0x10] sm:$0xff]
        %v1971 = vld [vmem:[#allocation3 + $0x18] sm:$0xff]
        %v1974 = vrot.slane %v1964, 1
        %v1975 = vrot.slane %v1965, 1
        %v1976 = vsel %vm255, %v1974, %v1975
        %v1983 = vrot.slane %v1969, 2
        %v1984 = vrot.slane %v1970, 2
        %v1985 = vsel %vm265, %v1983, %v1984
        %v1986 = vrot.slane %v1971, 2
        %v1987 = vsel %vm265, %v1984, %v1986
        %v1991 = vld [vmem:[#allocation4 + $0x340] sm:$0xf]
        %v1992 = vld [vmem:[#allocation4 + $0x344] sm:$0xf]
        %v1993 = vld [vmem:[#allocation4 + $0x348] sm:$0xf]
        %v1994 = vld [vmem:[#allocation4 + $0x34c] sm:$0xf]
        %v1995 = vld [vmem:[#allocation4 + $0x350] sm:$0xf]
        %v1996 = vld [vmem:[#allocation4 + $0x354] sm:$0xf]
        %v1997 = vld [vmem:[#allocation4 + $0x358] sm:$0xf]
        %v1998 = vld [vmem:[#allocation4 + $0x35c] sm:$0xf]
        %v1999 = vld [vmem:[#allocation4 + $0x360] sm:$0xf]
        %v2000 = vld [vmem:[#allocation4 + $0x364] sm:$0xf]
        %v2001 = vld [vmem:[#allocation4 + $0x368] sm:$0xf]
        %v2002 = vld [vmem:[#allocation4 + $0x36c] sm:$0xf]
        %v2003 = vld [vmem:[#allocation4 + $0x370] sm:$0xf]
        %v2004 = vld [vmem:[#allocation4 + $0x374] sm:$0xf]
        %v2005 = vld [vmem:[#allocation4 + $0x378] sm:$0xf]
        %v2006 = vld [vmem:[#allocation4 + $0x37c] sm:$0xf]
        %v2007 = vld [vmem:[#allocation4 + $0x380] sm:$0xf]
        %v2008 = vld [vmem:[#allocation4 + $0x384] sm:$0xf]
        %v2009 = vld [vmem:[#allocation4 + $0x388] sm:$0xf]
        %v2010 = vld [vmem:[#allocation4 + $0x38c] sm:$0xf]
        %v2011 = vld [vmem:[#allocation4 + $0x390] sm:$0xf]
        %v2012 = vld [vmem:[#allocation4 + $0x394] sm:$0xf]
        %v2013 = vld [vmem:[#allocation4 + $0x398] sm:$0xf]
        %v2014 = vld [vmem:[#allocation4 + $0x39c] sm:$0xf]
        %v2015 = vld [vmem:[#allocation4 + $0x3a0] sm:$0xf]
        %v2016 = vld [vmem:[#allocation4 + $0x3a4] sm:$0xf]
        %v2017 = vld [vmem:[#allocation4 + $0x3a8] sm:$0xf]
        %v2018 = vld [vmem:[#allocation4 + $0x3ac] sm:$0xf]
        %v2019 = vld [vmem:[#allocation4 + $0x3b0] sm:$0xf]
        %v2020 = vld [vmem:[#allocation4 + $0x3b4] sm:$0xf]
        %v2021 = vld [vmem:[#allocation4 + $0x3b8] sm:$0xf]
        %v2022 = vld [vmem:[#allocation4 + $0x3bc] sm:$0xf]
        %v2023 = vld [vmem:[#allocation4 + $0x3c0] sm:$0xf]
        %v2024 = vld [vmem:[#allocation4 + $0x3c4] sm:$0xf]
        %v2025 = vld [vmem:[#allocation4 + $0x3c8] sm:$0xf]
        %v2026 = vld [vmem:[#allocation4 + $0x3cc] sm:$0xf]
        %v2027 = vld [vmem:[#allocation4 + $0x3d0] sm:$0xf]
        %v2028 = vld [vmem:[#allocation4 + $0x3d4] sm:$0xf]
        %v2029 = vld [vmem:[#allocation4 + $0x3d8] sm:$0xf]
        %v2030 = vld [vmem:[#allocation4 + $0x3dc] sm:$0xf]
        %v2031 = vld [vmem:[#allocation4 + $0x3e0] sm:$0xf]
        %v2032 = vld [vmem:[#allocation4 + $0x3e4] sm:$0xf]
        %v2033 = vld [vmem:[#allocation4 + $0x3e8] sm:$0xf]
        %v2034 = vld [vmem:[#allocation4 + $0x3ec] sm:$0xf]
        %v2035 = vld [vmem:[#allocation4 + $0x3f0] sm:$0xf]
        %v2036 = vld [vmem:[#allocation4 + $0x3f4] sm:$0xf]
        %v2037 = vld [vmem:[#allocation4 + $0x3f8] sm:$0xf]
        %v2038 = vld [vmem:[#allocation4 + $0x3fc] sm:$0xf]
        %v2039 = vpack.c.bf16 %v1969, %v1968
        %v2040 = vpack.c.bf16 %v1976, %v1974
        %v2041 = vpack.c.bf16 %v1985, %v1983
        %v2042 = vpack.c.bf16 %v1970, %v1970
        %v2043 = vpack.c.bf16 %v1975, %v1975
        %v2044 = vpack.c.bf16 %v1987, %v1987
        %v2046 = vshrl.u32 %v2039, 16
        %v2048 = vrot.slane %v2046, 3
        %v2049 = vshll.u32 %v2039, 16
        %v2051 = vrot.slane %v2049, 4
        %v2052 = vor.u32 %v2048, %v2051
        %v2054 = vshrl.u32 %v2042, 16
        %v2056 = vrot.slane %v2054, 3
        %v2057 = vshll.u32 %v2042, 16
        %v2059 = vrot.slane %v2057, 4
        %v2060 = vor.u32 %v2056, %v2059
        %v2061 = vsel %vm328, %v2052, %v2060
        %v2063 = vshrl.u32 %v2040, 16
        %v2065 = vrot.slane %v2063, 3
        %v2066 = vshll.u32 %v2040, 16
        %v2068 = vrot.slane %v2066, 4
        %v2069 = vor.u32 %v2065, %v2068
        %v2071 = vshrl.u32 %v2043, 16
        %v2073 = vrot.slane %v2071, 3
        %v2074 = vshll.u32 %v2043, 16
        %v2076 = vrot.slane %v2074, 4
        %v2077 = vor.u32 %v2073, %v2076
        %v2078 = vsel %vm328, %v2069, %v2077
        %v2080 = vshrl.u32 %v2041, 16
        %v2082 = vrot.slane %v2080, 3
        %v2083 = vshll.u32 %v2041, 16
        %v2085 = vrot.slane %v2083, 4
        %v2086 = vor.u32 %v2082, %v2085
        %v2088 = vshrl.u32 %v2044, 16
        %v2090 = vrot.slane %v2088, 3
        %v2091 = vshll.u32 %v2044, 16
        %v2093 = vrot.slane %v2091, 4
        %v2094 = vor.u32 %v2090, %v2093
        %v2095 = vsel %vm328, %v2086, %v2094
        %v2147 = vunpack.c.l.b16 %v1991
        %v2148 = vunpack.c.l.b16 %v1992
        %v2149 = vunpack.c.l.b16 %v1993
        %v2150 = vunpack.c.l.b16 %v1994
        %v2151 = vunpack.c.l.b16 %v1995
        %v2152 = vunpack.c.l.b16 %v1996
        %v2153 = vunpack.c.l.b16 %v1997
        %v2154 = vunpack.c.l.b16 %v1998
        %v2155 = vunpack.c.l.b16 %v1999
        %v2156 = vunpack.c.l.b16 %v2000
        %v2157 = vunpack.c.l.b16 %v2001
        %v2158 = vunpack.c.l.b16 %v2002
        %v2159 = vunpack.c.l.b16 %v2003
        %v2160 = vunpack.c.l.b16 %v2004
        %v2161 = vunpack.c.l.b16 %v2005
        %v2162 = vunpack.c.l.b16 %v2006
        %v2163 = vunpack.c.l.b16 %v2007
        %v2164 = vunpack.c.l.b16 %v2008
        %v2165 = vunpack.c.l.b16 %v2009
        %v2166 = vunpack.c.l.b16 %v2010
        %v2167 = vunpack.c.l.b16 %v2011
        %v2168 = vunpack.c.l.b16 %v2012
        %v2169 = vunpack.c.l.b16 %v2013
        %v2170 = vunpack.c.l.b16 %v2014
        %v2171 = vunpack.c.l.b16 %v2015
        %v2172 = vunpack.c.l.b16 %v2016
        %v2173 = vunpack.c.l.b16 %v2017
        %v2174 = vunpack.c.l.b16 %v2018
        %v2175 = vunpack.c.l.b16 %v2019
        %v2176 = vunpack.c.l.b16 %v2020
        %v2177 = vunpack.c.l.b16 %v2021
        %v2178 = vunpack.c.l.b16 %v2022
        %v2179 = vunpack.c.l.b16 %v2023
        %v2180 = vunpack.c.l.b16 %v2024
        %v2181 = vunpack.c.l.b16 %v2025
        %v2182 = vunpack.c.l.b16 %v2026
        %v2183 = vunpack.c.l.b16 %v2027
        %v2184 = vunpack.c.l.b16 %v2028
        %v2185 = vunpack.c.l.b16 %v2029
        %v2186 = vunpack.c.l.b16 %v2030
        %v2187 = vunpack.c.l.b16 %v2031
        %v2188 = vunpack.c.l.b16 %v2032
        %v2189 = vunpack.c.l.b16 %v2033
        %v2190 = vunpack.c.l.b16 %v2034
        %v2191 = vunpack.c.l.b16 %v2035
        %v2192 = vunpack.c.l.b16 %v2036
        %v2193 = vunpack.c.l.b16 %v2037
        %v2194 = vunpack.c.l.b16 %v2038
        %v2195 = vpack.c.b16 %v2148, %v2147
        %v2196 = vpack.c.b16 %v2150, %v2149
        %v2197 = vpack.c.b16 %v2152, %v2151
        %v2198 = vpack.c.b16 %v2154, %v2153
        %v2199 = vpack.c.b16 %v2156, %v2155
        %v2200 = vpack.c.b16 %v2158, %v2157
        %v2201 = vpack.c.b16 %v2160, %v2159
        %v2202 = vpack.c.b16 %v2162, %v2161
        %v2203 = vpack.c.b16 %v2164, %v2163
        %v2204 = vpack.c.b16 %v2166, %v2165
        %v2205 = vpack.c.b16 %v2168, %v2167
        %v2206 = vpack.c.b16 %v2170, %v2169
        %v2207 = vpack.c.b16 %v2172, %v2171
        %v2208 = vpack.c.b16 %v2174, %v2173
        %v2209 = vpack.c.b16 %v2176, %v2175
        %v2210 = vpack.c.b16 %v2178, %v2177
        %v2211 = vpack.c.b16 %v2180, %v2179
        %v2212 = vpack.c.b16 %v2182, %v2181
        %v2213 = vpack.c.b16 %v2184, %v2183
        %v2214 = vpack.c.b16 %v2186, %v2185
        %v2215 = vpack.c.b16 %v2188, %v2187
        %v2216 = vpack.c.b16 %v2190, %v2189
        %v2217 = vpack.c.b16 %v2192, %v2191
        %v2218 = vpack.c.b16 %v2194, %v2193
        %2243 = vmatprep.subr.bf16.mxu0 0
        %2244 = vmatpush1.bf16.msra.mxu0 %v2195
        %2245 = vmatprep.subr.bf16.mxu0 0
        %2246 = vmatpush1.bf16.msra.mxu0 %v2196
        %2247 = vmatprep.subr.bf16.mxu0 0
        %2248 = vmatpush1.bf16.msra.mxu0 %v2197
        %2249 = vmatprep.subr.bf16.mxu0 0
        %2250 = vmatpush1.bf16.msra.mxu0 %v2198
        %2251 = vmatprep.subr.bf16.mxu0 0
        %2252 = vmatpush1.bf16.msra.mxu0 %v2199
        %2253 = vmatprep.subr.bf16.mxu0 0
        %2254 = vmatpush1.bf16.msra.mxu0 %v2200
        %2255 = vmatprep.subr.bf16.mxu0 0
        %2256 = vmatpush1.bf16.msra.mxu0 %v2201
        %2257 = vmatprep.subr.bf16.mxu0 0
        %2258 = vmatpush1.bf16.msra.mxu0 %v2202
        %2259 = vmatprep.subr.bf16.mxu0 0
        %2260 = vmatpush1.bf16.msra.mxu0 %v2203
        %2261 = vmatprep.subr.bf16.mxu0 0
        %2262 = vmatpush1.bf16.msra.mxu0 %v2204
        %2263 = vmatprep.subr.bf16.mxu0 0
        %2264 = vmatpush1.bf16.msra.mxu0 %v2205
        %2265 = vmatprep.subr.bf16.mxu0 0
        %2266 = vmatpush1.bf16.msra.mxu0 %v2206
        %2267 = vmatprep.subr.bf16.mxu0 0
        %2268 = vmatpush1.bf16.msra.mxu0 %v2207
        %2269 = vmatprep.subr.bf16.mxu0 0
        %2270 = vmatpush1.bf16.msra.mxu0 %v2208
        %2271 = vmatprep.subr.bf16.mxu0 0
        %2272 = vmatpush1.bf16.msra.mxu0 %v2209
        %2273 = vmatprep.subr.bf16.mxu0 0
        %2274 = vmatpush1.bf16.msra.mxu0 %v2210
        %2275 = vmatprep.mubr.bf16.mxu0 %v2078
        %2276 = vmatmul.mubr.bf16.gmra.mrb[0].mxu0 %v2061
        %v2277 = vpop.f32.mrb[0].mxu0
        %v2278 = vadd.f32 0.0, %v2277
        %v2279 = vpop.f32.mrb[0].mxu0
        %v2280 = vpop.f32.mrb[0].mxu0
        %v2281 = vadd.f32 0.0, %v2280
        %v2282 = vpop.f32.mrb[0].mxu0
        %2283 = vdwg.mxu0
        %2284 = vmatprep.subr.bf16.mxu0 0
        %2285 = vmatpush1.bf16.msra.mxu0 %v2211
        %2286 = vmatprep.subr.bf16.mxu0 0
        %2287 = vmatpush1.bf16.msra.mxu0 %v2212
        %2288 = vmatprep.subr.bf16.mxu0 0
        %2289 = vmatpush1.bf16.msra.mxu0 %v2213
        %2290 = vmatprep.subr.bf16.mxu0 0
        %2291 = vmatpush1.bf16.msra.mxu0 %v2214
        %2292 = vmatprep.subr.bf16.mxu0 0
        %2293 = vmatpush1.bf16.msra.mxu0 %v2215
        %2294 = vmatprep.subr.bf16.mxu0 0
        %2295 = vmatpush1.bf16.msra.mxu0 %v2216
        %2296 = vmatprep.subr.bf16.mxu0 0
        %2297 = vmatpush1.bf16.msra.mxu0 %v2217
        %2298 = vmatprep.subr.bf16.mxu0 0
        %2299 = vmatpush1.bf16.msra.mxu0 %v2218
        %2300 = vmatprep.subr.bf16.mxu0 0
        %2301 = vmatpush1.bf16.msra.mxu0 0
        %2302 = vmatprep.subr.bf16.mxu0 0
        %2303 = vmatpush1.bf16.msra.mxu0 0
        %2304 = vmatprep.subr.bf16.mxu0 0
        %2305 = vmatpush1.bf16.msra.mxu0 0
        %2306 = vmatprep.subr.bf16.mxu0 0
        %2307 = vmatpush1.bf16.msra.mxu0 0
        %2308 = vmatprep.subr.bf16.mxu0 0
        %2309 = vmatpush1.bf16.msra.mxu0 0
        %2310 = vmatprep.subr.bf16.mxu0 0
        %2311 = vmatpush1.bf16.msra.mxu0 0
        %2312 = vmatprep.subr.bf16.mxu0 0
        %2313 = vmatpush1.bf16.msra.mxu0 0
        %2314 = vmatprep.subr.bf16.mxu0 0
        %2315 = vmatpush1.bf16.msra.mxu0 0
        %2316 = vmatprep.mubr.bf16.mxu0 0
        %2317 = vmatmul.mubr.bf16.gmra.mrb[0].mxu0 %v2095
        %v2318 = vpop.f32.mrb[0].mxu0
        %v2319 = vadd.f32 %v2278, %v2318
        %v2320 = vpop.f32.mrb[0].mxu0
        %v2321 = vpop.f32.mrb[0].mxu0
        %v2322 = vadd.f32 %v2281, %v2321
        %v2323 = vpop.f32.mrb[0].mxu0
        %2324 = vdwg.mxu0
        %v2325 = vadd.f32 %v1826, %v2319
        %v2326 = vadd.f32 %v1827, %v2322
        %2327 = vst [vmem:[#allocation2] sm:$0xff] %v2325
        %2328 = vst [vmem:[#allocation2 + $0x8] sm:$0xff] %v2326
        %v2329 = vld [vmem:[#allocation2] sm:$0xff]
        %v2330 = vld [vmem:[#allocation2 + $0x8] sm:$0xff]
        %v2331 = vld [vmem:[%s1 + $0x8] sm:$0x1]
        %v2332 = vld [vmem:[%s2 + $0x8] sm:$0x1]
        %v2333 = vlaneseq
        %v2334 = vshrl.u32 %v2333, 7
        %v2335 = vsub.s32 0, %v2334
        %v2336 = vrot.slane %v2331, %v2335
        %v2337 = vmul.f32 %v2329, %v2336
        %v2338 = vmul.f32 %v2330, %v2336
        %v2339 = vlaneseq
        %v2340 = vshrl.u32 %v2339, 7
        %v2341 = vsub.s32 0, %v2340
        %v2342 = vrot.slane %v2332, %v2341
        %v2343 = vadd.f32 %v2337, %v2342
        %v2344 = vadd.f32 %v2338, %v2342
        %v2345 = vmax.f32 %v2343, 0.0
        %v2346 = vmax.f32 %v2344, 0.0
        %v2347 = vld [vmem:[#allocation4 + $0x400] sm:$0xf]
        %v2348 = vld [vmem:[#allocation4 + $0x404] sm:$0xf]
        %v2349 = vld [vmem:[#allocation4 + $0x408] sm:$0xf]
        %v2350 = vld [vmem:[#allocation4 + $0x40c] sm:$0xf]
        %v2351 = vld [vmem:[#allocation4 + $0x410] sm:$0xf]
        %v2352 = vld [vmem:[#allocation4 + $0x414] sm:$0xf]
        %v2353 = vld [vmem:[#allocation4 + $0x418] sm:$0xf]
        %v2354 = vld [vmem:[#allocation4 + $0x41c] sm:$0xf]
        %v2355 = vld [vmem:[#allocation4 + $0x420] sm:$0xf]
        %v2356 = vld [vmem:[#allocation4 + $0x424] sm:$0xf]
        %v2357 = vld [vmem:[#allocation4 + $0x428] sm:$0xf]
        %v2358 = vld [vmem:[#allocation4 + $0x42c] sm:$0xf]
        %v2359 = vld [vmem:[#allocation4 + $0x430] sm:$0xf]
        %v2360 = vld [vmem:[#allocation4 + $0x434] sm:$0xf]
        %v2361 = vld [vmem:[#allocation4 + $0x438] sm:$0xf]
        %v2362 = vld [vmem:[#allocation4 + $0x43c] sm:$0xf]
        %v2363 = vpack.c.bf16 %v2346, %v2345
        %v2380 = vunpack.c.l.b16 %v2347
        %v2381 = vunpack.c.l.b16 %v2348
        %v2382 = vunpack.c.l.b16 %v2349
        %v2383 = vunpack.c.l.b16 %v2350
        %v2384 = vunpack.c.l.b16 %v2351
        %v2385 = vunpack.c.l.b16 %v2352
        %v2386 = vunpack.c.l.b16 %v2353
        %v2387 = vunpack.c.l.b16 %v2354
        %v2388 = vunpack.c.l.b16 %v2355
        %v2389 = vunpack.c.l.b16 %v2356
        %v2390 = vunpack.c.l.b16 %v2357
        %v2391 = vunpack.c.l.b16 %v2358
        %v2392 = vunpack.c.l.b16 %v2359
        %v2393 = vunpack.c.l.b16 %v2360
        %v2394 = vunpack.c.l.b16 %v2361
        %v2395 = vunpack.c.l.b16 %v2362
        %v2396 = vpack.c.b16 %v2381, %v2380
        %v2397 = vpack.c.b16 %v2383, %v2382
        %v2398 = vpack.c.b16 %v2385, %v2384
        %v2399 = vpack.c.b16 %v2387, %v2386
        %v2400 = vpack.c.b16 %v2389, %v2388
        %v2401 = vpack.c.b16 %v2391, %v2390
        %v2402 = vpack.c.b16 %v2393, %v2392
        %v2403 = vpack.c.b16 %v2395, %v2394
        %2412 = vmatprep.subr.bf16.mxu0 0
        %2413 = vmatpush1.bf16.msra.mxu0 %v2396
        %2414 = vmatprep.subr.bf16.mxu0 0
        %2415 = vmatpush1.bf16.msra.mxu0 %v2397
        %2416 = vmatprep.subr.bf16.mxu0 0
        %2417 = vmatpush1.bf16.msra.mxu0 %v2398
        %2418 = vmatprep.subr.bf16.mxu0 0
        %2419 = vmatpush1.bf16.msra.mxu0 %v2399
        %2420 = vmatprep.subr.bf16.mxu0 0
        %2421 = vmatpush1.bf16.msra.mxu0 %v2400
        %2422 = vmatprep.subr.bf16.mxu0 0
        %2423 = vmatpush1.bf16.msra.mxu0 %v2401
        %2424 = vmatprep.subr.bf16.mxu0 0
        %2425 = vmatpush1.bf16.msra.mxu0 %v2402
        %2426 = vmatprep.subr.bf16.mxu0 0
        %2427 = vmatpush1.bf16.msra.mxu0 %v2403
        %2428 = vmatprep.subr.bf16.mxu0 0
        %2429 = vmatpush1.bf16.msra.mxu0 0
        %2430 = vmatprep.subr.bf16.mxu0 0
        %2431 = vmatpush1.bf16.msra.mxu0 0
        %2432 = vmatprep.subr.bf16.mxu0 0
        %2433 = vmatpush1.bf16.msra.mxu0 0
        %2434 = vmatprep.subr.bf16.mxu0 0
        %2435 = vmatpush1.bf16.msra.mxu0 0
        %2436 = vmatprep.subr.bf16.mxu0 0
        %2437 = vmatpush1.bf16.msra.mxu0 0
        %2438 = vmatprep.subr.bf16.mxu0 0
        %2439 = vmatpush1.bf16.msra.mxu0 0
        %2440 = vmatprep.subr.bf16.mxu0 0
        %2441 = vmatpush1.bf16.msra.mxu0 0
        %2442 = vmatprep.subr.bf16.mxu0 0
        %2443 = vmatpush1.bf16.msra.mxu0 0
        %2444 = vmatprep.mubr.bf16.mxu0 0
        %2445 = vmatmul.mubr.bf16.gmra.mrb[0].mxu0 %v2363
        %v2446 = vpop.f32.mrb[0].mxu0
        %v2447 = vadd.f32 0.0, %v2446
        %v2448 = vpop.f32.mrb[0].mxu0
        %v2449 = vpop.f32.mrb[0].mxu0
        %v2450 = vadd.f32 0.0, %v2449
        %v2451 = vpop.f32.mrb[0].mxu0
        %2452 = vdwg.mxu0
        %v2453 = vld [vmem:[%s1 + $0x9] sm:$0x1]
        %v2454 = vld [vmem:[%s2 + $0x9] sm:$0x1]
        %v2455 = vlaneseq
        %v2456 = vshrl.u32 %v2455, 7
        %v2457 = vsub.s32 0, %v2456
        %v2458 = vrot.slane %v2453, %v2457
        %v2459 = vmul.f32 %v2447, %v2458
        %v2460 = vmul.f32 %v2450, %v2458
        %v2461 = vlaneseq
        %v2462 = vshrl.u32 %v2461, 7
        %v2463 = vsub.s32 0, %v2462
        %v2464 = vrot.slane %v2454, %v2463
        %v2465 = vadd.f32 %v2459, %v2464
        %v2466 = vadd.f32 %v2460, %v2464
        %v2467 = vmax.f32 %v2465, 0.0
        %v2468 = vmax.f32 %v2466, 0.0
        %2469 = vst [vmem:[#allocation3 + $0x8] sm:$0xff] %v2467
        %2470 = vst [vmem:[#allocation3 + $0x10] sm:$0xff] %v2468
        %v2471 = vld [vmem:[#allocation3] sm:$0xff]
        %v2472 = vld [vmem:[#allocation3 + $0x8] sm:$0xff]
        %v2473 = vld [vmem:[#allocation3 + $0x10] sm:$0xff]
        %v2474 = vld [vmem:[#allocation3 + $0x18] sm:$0xff]
        %v2477 = vrot.slane %v2467, 1
        %v2478 = vrot.slane %v2468, 1
        %v2479 = vsel %vm255, %v2477, %v2478
        %v2486 = vrot.slane %v2472, 2
        %v2487 = vrot.slane %v2473, 2
        %v2488 = vsel %vm265, %v2486, %v2487
        %v2489 = vrot.slane %v2474, 2
        %v2490 = vsel %vm265, %v2487, %v2489
        %v2494 = vld [vmem:[#allocation4 + $0x440] sm:$0xf]
        %v2495 = vld [vmem:[#allocation4 + $0x444] sm:$0xf]
        %v2496 = vld [vmem:[#allocation4 + $0x448] sm:$0xf]
        %v2497 = vld [vmem:[#allocation4 + $0x44c] sm:$0xf]
        %v2498 = vld [vmem:[#allocation4 + $0x450] sm:$0xf]
        %v2499 = vld [vmem:[#allocation4 + $0x454] sm:$0xf]
        %v2500 = vld [vmem:[#allocation4 + $0x458] sm:$0xf]
        %v2501 = vld [vmem:[#allocation4 + $0x45c] sm:$0xf]
        %v2502 = vld [vmem:[#allocation4 + $0x460] sm:$0xf]
        %v2503 = vld [vmem:[#allocation4 + $0x464] sm:$0xf]
        %v2504 = vld [vmem:[#allocation4 + $0x468] sm:$0xf]
        %v2505 = vld [vmem:[#allocation4 + $0x46c] sm:$0xf]
        %v2506 = vld [vmem:[#allocation4 + $0x470] sm:$0xf]
        %v2507 = vld [vmem:[#allocation4 + $0x474] sm:$0xf]
        %v2508 = vld [vmem:[#allocation4 + $0x478] sm:$0xf]
        %v2509 = vld [vmem:[#allocation4 + $0x47c] sm:$0xf]
        %v2510 = vld [vmem:[#allocation4 + $0x480] sm:$0xf]
        %v2511 = vld [vmem:[#allocation4 + $0x484] sm:$0xf]
        %v2512 = vld [vmem:[#allocation4 + $0x488] sm:$0xf]
        %v2513 = vld [vmem:[#allocation4 + $0x48c] sm:$0xf]
        %v2514 = vld [vmem:[#allocation4 + $0x490] sm:$0xf]
        %v2515 = vld [vmem:[#allocation4 + $0x494] sm:$0xf]
        %v2516 = vld [vmem:[#allocation4 + $0x498] sm:$0xf]
        %v2517 = vld [vmem:[#allocation4 + $0x49c] sm:$0xf]
        %v2518 = vld [vmem:[#allocation4 + $0x4a0] sm:$0xf]
        %v2519 = vld [vmem:[#allocation4 + $0x4a4] sm:$0xf]
        %v2520 = vld [vmem:[#allocation4 + $0x4a8] sm:$0xf]
        %v2521 = vld [vmem:[#allocation4 + $0x4ac] sm:$0xf]
        %v2522 = vld [vmem:[#allocation4 + $0x4b0] sm:$0xf]
        %v2523 = vld [vmem:[#allocation4 + $0x4b4] sm:$0xf]
        %v2524 = vld [vmem:[#allocation4 + $0x4b8] sm:$0xf]
        %v2525 = vld [vmem:[#allocation4 + $0x4bc] sm:$0xf]
        %v2526 = vld [vmem:[#allocation4 + $0x4c0] sm:$0xf]
        %v2527 = vld [vmem:[#allocation4 + $0x4c4] sm:$0xf]
        %v2528 = vld [vmem:[#allocation4 + $0x4c8] sm:$0xf]
        %v2529 = vld [vmem:[#allocation4 + $0x4cc] sm:$0xf]
        %v2530 = vld [vmem:[#allocation4 + $0x4d0] sm:$0xf]
        %v2531 = vld [vmem:[#allocation4 + $0x4d4] sm:$0xf]
        %v2532 = vld [vmem:[#allocation4 + $0x4d8] sm:$0xf]
        %v2533 = vld [vmem:[#allocation4 + $0x4dc] sm:$0xf]
        %v2534 = vld [vmem:[#allocation4 + $0x4e0] sm:$0xf]
        %v2535 = vld [vmem:[#allocation4 + $0x4e4] sm:$0xf]
        %v2536 = vld [vmem:[#allocation4 + $0x4e8] sm:$0xf]
        %v2537 = vld [vmem:[#allocation4 + $0x4ec] sm:$0xf]
        %v2538 = vld [vmem:[#allocation4 + $0x4f0] sm:$0xf]
        %v2539 = vld [vmem:[#allocation4 + $0x4f4] sm:$0xf]
        %v2540 = vld [vmem:[#allocation4 + $0x4f8] sm:$0xf]
        %v2541 = vld [vmem:[#allocation4 + $0x4fc] sm:$0xf]
        %v2542 = vpack.c.bf16 %v2472, %v2471
        %v2543 = vpack.c.bf16 %v2479, %v2477
        %v2544 = vpack.c.bf16 %v2488, %v2486
        %v2545 = vpack.c.bf16 %v2473, %v2473
        %v2546 = vpack.c.bf16 %v2478, %v2478
        %v2547 = vpack.c.bf16 %v2490, %v2490
        %v2549 = vshrl.u32 %v2542, 16
        %v2551 = vrot.slane %v2549, 3
        %v2552 = vshll.u32 %v2542, 16
        %v2554 = vrot.slane %v2552, 4
        %v2555 = vor.u32 %v2551, %v2554
        %v2557 = vshrl.u32 %v2545, 16
        %v2559 = vrot.slane %v2557, 3
        %v2560 = vshll.u32 %v2545, 16
        %v2562 = vrot.slane %v2560, 4
        %v2563 = vor.u32 %v2559, %v2562
        %v2564 = vsel %vm328, %v2555, %v2563
        %v2566 = vshrl.u32 %v2543, 16
        %v2568 = vrot.slane %v2566, 3
        %v2569 = vshll.u32 %v2543, 16
        %v2571 = vrot.slane %v2569, 4
        %v2572 = vor.u32 %v2568, %v2571
        %v2574 = vshrl.u32 %v2546, 16
        %v2576 = vrot.slane %v2574, 3
        %v2577 = vshll.u32 %v2546, 16
        %v2579 = vrot.slane %v2577, 4
        %v2580 = vor.u32 %v2576, %v2579
        %v2581 = vsel %vm328, %v2572, %v2580
        %v2583 = vshrl.u32 %v2544, 16
        %v2585 = vrot.slane %v2583, 3
        %v2586 = vshll.u32 %v2544, 16
        %v2588 = vrot.slane %v2586, 4
        %v2589 = vor.u32 %v2585, %v2588
        %v2591 = vshrl.u32 %v2547, 16
        %v2593 = vrot.slane %v2591, 3
        %v2594 = vshll.u32 %v2547, 16
        %v2596 = vrot.slane %v2594, 4
        %v2597 = vor.u32 %v2593, %v2596
        %v2598 = vsel %vm328, %v2589, %v2597
        %v2650 = vunpack.c.l.b16 %v2494
        %v2651 = vunpack.c.l.b16 %v2495
        %v2652 = vunpack.c.l.b16 %v2496
        %v2653 = vunpack.c.l.b16 %v2497
        %v2654 = vunpack.c.l.b16 %v2498
        %v2655 = vunpack.c.l.b16 %v2499
        %v2656 = vunpack.c.l.b16 %v2500
        %v2657 = vunpack.c.l.b16 %v2501
        %v2658 = vunpack.c.l.b16 %v2502
        %v2659 = vunpack.c.l.b16 %v2503
        %v2660 = vunpack.c.l.b16 %v2504
        %v2661 = vunpack.c.l.b16 %v2505
        %v2662 = vunpack.c.l.b16 %v2506
        %v2663 = vunpack.c.l.b16 %v2507
        %v2664 = vunpack.c.l.b16 %v2508
        %v2665 = vunpack.c.l.b16 %v2509
        %v2666 = vunpack.c.l.b16 %v2510
        %v2667 = vunpack.c.l.b16 %v2511
        %v2668 = vunpack.c.l.b16 %v2512
        %v2669 = vunpack.c.l.b16 %v2513
        %v2670 = vunpack.c.l.b16 %v2514
        %v2671 = vunpack.c.l.b16 %v2515
        %v2672 = vunpack.c.l.b16 %v2516
        %v2673 = vunpack.c.l.b16 %v2517
        %v2674 = vunpack.c.l.b16 %v2518
        %v2675 = vunpack.c.l.b16 %v2519
        %v2676 = vunpack.c.l.b16 %v2520
        %v2677 = vunpack.c.l.b16 %v2521
        %v2678 = vunpack.c.l.b16 %v2522
        %v2679 = vunpack.c.l.b16 %v2523
        %v2680 = vunpack.c.l.b16 %v2524
        %v2681 = vunpack.c.l.b16 %v2525
        %v2682 = vunpack.c.l.b16 %v2526
        %v2683 = vunpack.c.l.b16 %v2527
        %v2684 = vunpack.c.l.b16 %v2528
        %v2685 = vunpack.c.l.b16 %v2529
        %v2686 = vunpack.c.l.b16 %v2530
        %v2687 = vunpack.c.l.b16 %v2531
        %v2688 = vunpack.c.l.b16 %v2532
        %v2689 = vunpack.c.l.b16 %v2533
        %v2690 = vunpack.c.l.b16 %v2534
        %v2691 = vunpack.c.l.b16 %v2535
        %v2692 = vunpack.c.l.b16 %v2536
        %v2693 = vunpack.c.l.b16 %v2537
        %v2694 = vunpack.c.l.b16 %v2538
        %v2695 = vunpack.c.l.b16 %v2539
        %v2696 = vunpack.c.l.b16 %v2540
        %v2697 = vunpack.c.l.b16 %v2541
        %v2698 = vpack.c.b16 %v2651, %v2650
        %v2699 = vpack.c.b16 %v2653, %v2652
        %v2700 = vpack.c.b16 %v2655, %v2654
        %v2701 = vpack.c.b16 %v2657, %v2656
        %v2702 = vpack.c.b16 %v2659, %v2658
        %v2703 = vpack.c.b16 %v2661, %v2660
        %v2704 = vpack.c.b16 %v2663, %v2662
        %v2705 = vpack.c.b16 %v2665, %v2664
        %v2706 = vpack.c.b16 %v2667, %v2666
        %v2707 = vpack.c.b16 %v2669, %v2668
        %v2708 = vpack.c.b16 %v2671, %v2670
        %v2709 = vpack.c.b16 %v2673, %v2672
        %v2710 = vpack.c.b16 %v2675, %v2674
        %v2711 = vpack.c.b16 %v2677, %v2676
        %v2712 = vpack.c.b16 %v2679, %v2678
        %v2713 = vpack.c.b16 %v2681, %v2680
        %v2714 = vpack.c.b16 %v2683, %v2682
        %v2715 = vpack.c.b16 %v2685, %v2684
        %v2716 = vpack.c.b16 %v2687, %v2686
        %v2717 = vpack.c.b16 %v2689, %v2688
        %v2718 = vpack.c.b16 %v2691, %v2690
        %v2719 = vpack.c.b16 %v2693, %v2692
        %v2720 = vpack.c.b16 %v2695, %v2694
        %v2721 = vpack.c.b16 %v2697, %v2696
        %2746 = vmatprep.subr.bf16.mxu0 0
        %2747 = vmatpush1.bf16.msra.mxu0 %v2698
        %2748 = vmatprep.subr.bf16.mxu0 0
        %2749 = vmatpush1.bf16.msra.mxu0 %v2699
        %2750 = vmatprep.subr.bf16.mxu0 0
        %2751 = vmatpush1.bf16.msra.mxu0 %v2700
        %2752 = vmatprep.subr.bf16.mxu0 0
        %2753 = vmatpush1.bf16.msra.mxu0 %v2701
        %2754 = vmatprep.subr.bf16.mxu0 0
        %2755 = vmatpush1.bf16.msra.mxu0 %v2702
        %2756 = vmatprep.subr.bf16.mxu0 0
        %2757 = vmatpush1.bf16.msra.mxu0 %v2703
        %2758 = vmatprep.subr.bf16.mxu0 0
        %2759 = vmatpush1.bf16.msra.mxu0 %v2704
        %2760 = vmatprep.subr.bf16.mxu0 0
        %2761 = vmatpush1.bf16.msra.mxu0 %v2705
        %2762 = vmatprep.subr.bf16.mxu0 0
        %2763 = vmatpush1.bf16.msra.mxu0 %v2706
        %2764 = vmatprep.subr.bf16.mxu0 0
        %2765 = vmatpush1.bf16.msra.mxu0 %v2707
        %2766 = vmatprep.subr.bf16.mxu0 0
        %2767 = vmatpush1.bf16.msra.mxu0 %v2708
        %2768 = vmatprep.subr.bf16.mxu0 0
        %2769 = vmatpush1.bf16.msra.mxu0 %v2709
        %2770 = vmatprep.subr.bf16.mxu0 0
        %2771 = vmatpush1.bf16.msra.mxu0 %v2710
        %2772 = vmatprep.subr.bf16.mxu0 0
        %2773 = vmatpush1.bf16.msra.mxu0 %v2711
        %2774 = vmatprep.subr.bf16.mxu0 0
        %2775 = vmatpush1.bf16.msra.mxu0 %v2712
        %2776 = vmatprep.subr.bf16.mxu0 0
        %2777 = vmatpush1.bf16.msra.mxu0 %v2713
        %2778 = vmatprep.mubr.bf16.mxu0 %v2581
        %2779 = vmatmul.mubr.bf16.gmra.mrb[0].mxu0 %v2564
        %v2780 = vpop.f32.mrb[0].mxu0
        %v2781 = vadd.f32 0.0, %v2780
        %v2782 = vpop.f32.mrb[0].mxu0
        %v2783 = vpop.f32.mrb[0].mxu0
        %v2784 = vadd.f32 0.0, %v2783
        %v2785 = vpop.f32.mrb[0].mxu0
        %2786 = vdwg.mxu0
        %2787 = vmatprep.subr.bf16.mxu0 0
        %2788 = vmatpush1.bf16.msra.mxu0 %v2714
        %2789 = vmatprep.subr.bf16.mxu0 0
        %2790 = vmatpush1.bf16.msra.mxu0 %v2715
        %2791 = vmatprep.subr.bf16.mxu0 0
        %2792 = vmatpush1.bf16.msra.mxu0 %v2716
        %2793 = vmatprep.subr.bf16.mxu0 0
        %2794 = vmatpush1.bf16.msra.mxu0 %v2717
        %2795 = vmatprep.subr.bf16.mxu0 0
        %2796 = vmatpush1.bf16.msra.mxu0 %v2718
        %2797 = vmatprep.subr.bf16.mxu0 0
        %2798 = vmatpush1.bf16.msra.mxu0 %v2719
        %2799 = vmatprep.subr.bf16.mxu0 0
        %2800 = vmatpush1.bf16.msra.mxu0 %v2720
        %2801 = vmatprep.subr.bf16.mxu0 0
        %2802 = vmatpush1.bf16.msra.mxu0 %v2721
        %2803 = vmatprep.subr.bf16.mxu0 0
        %2804 = vmatpush1.bf16.msra.mxu0 0
        %2805 = vmatprep.subr.bf16.mxu0 0
        %2806 = vmatpush1.bf16.msra.mxu0 0
        %2807 = vmatprep.subr.bf16.mxu0 0
        %2808 = vmatpush1.bf16.msra.mxu0 0
        %2809 = vmatprep.subr.bf16.mxu0 0
        %2810 = vmatpush1.bf16.msra.mxu0 0
        %2811 = vmatprep.subr.bf16.mxu0 0
        %2812 = vmatpush1.bf16.msra.mxu0 0
        %2813 = vmatprep.subr.bf16.mxu0 0
        %2814 = vmatpush1.bf16.msra.mxu0 0
        %2815 = vmatprep.subr.bf16.mxu0 0
        %2816 = vmatpush1.bf16.msra.mxu0 0
        %2817 = vmatprep.subr.bf16.mxu0 0
        %2818 = vmatpush1.bf16.msra.mxu0 0
        %2819 = vmatprep.mubr.bf16.mxu0 0
        %2820 = vmatmul.mubr.bf16.gmra.mrb[0].mxu0 %v2598
        %v2821 = vpop.f32.mrb[0].mxu0
        %v2822 = vadd.f32 %v2781, %v2821
        %v2823 = vpop.f32.mrb[0].mxu0
        %v2824 = vpop.f32.mrb[0].mxu0
        %v2825 = vadd.f32 %v2784, %v2824
        %v2826 = vpop.f32.mrb[0].mxu0
        %2827 = vdwg.mxu0
        %v2828 = vadd.f32 %v2329, %v2822
        %v2829 = vadd.f32 %v2330, %v2825
        %2830 = vst [vmem:[#allocation2] sm:$0xff] %v2828
        %2831 = vst [vmem:[#allocation2 + $0x8] sm:$0xff] %v2829
        %v2832 = vld [vmem:[#allocation2] sm:$0xff]
        %v2833 = vld [vmem:[#allocation2 + $0x8] sm:$0xff]
        %v2834 = vld [vmem:[%s1 + $0xa] sm:$0x1]
        %v2835 = vld [vmem:[%s2 + $0xa] sm:$0x1]
        %v2836 = vlaneseq
        %v2837 = vshrl.u32 %v2836, 7
        %v2838 = vsub.s32 0, %v2837
        %v2839 = vrot.slane %v2834, %v2838
        %v2840 = vmul.f32 %v2832, %v2839
        %v2841 = vmul.f32 %v2833, %v2839
        %v2842 = vlaneseq
        %v2843 = vshrl.u32 %v2842, 7
        %v2844 = vsub.s32 0, %v2843
        %v2845 = vrot.slane %v2835, %v2844
        %v2846 = vadd.f32 %v2840, %v2845
        %v2847 = vadd.f32 %v2841, %v2845
        %v2848 = vmax.f32 %v2846, 0.0
        %v2849 = vmax.f32 %v2847, 0.0
        %v2850 = vld [vmem:[#allocation4 + $0x500] sm:$0xf]
        %v2851 = vld [vmem:[#allocation4 + $0x504] sm:$0xf]
        %v2852 = vld [vmem:[#allocation4 + $0x508] sm:$0xf]
        %v2853 = vld [vmem:[#allocation4 + $0x50c] sm:$0xf]
        %v2854 = vld [vmem:[#allocation4 + $0x510] sm:$0xf]
        %v2855 = vld [vmem:[#allocation4 + $0x514] sm:$0xf]
        %v2856 = vld [vmem:[#allocation4 + $0x518] sm:$0xf]
        %v2857 = vld [vmem:[#allocation4 + $0x51c] sm:$0xf]
        %v2858 = vld [vmem:[#allocation4 + $0x520] sm:$0xf]
        %v2859 = vld [vmem:[#allocation4 + $0x524] sm:$0xf]
        %v2860 = vld [vmem:[#allocation4 + $0x528] sm:$0xf]
        %v2861 = vld [vmem:[#allocation4 + $0x52c] sm:$0xf]
        %v2862 = vld [vmem:[#allocation4 + $0x530] sm:$0xf]
        %v2863 = vld [vmem:[#allocation4 + $0x534] sm:$0xf]
        %v2864 = vld [vmem:[#allocation4 + $0x538] sm:$0xf]
        %v2865 = vld [vmem:[#allocation4 + $0x53c] sm:$0xf]
        %v2866 = vpack.c.bf16 %v2849, %v2848
        %v2867 = vld [vmem:[%s4] sm:$0x1]
        %v2869 = vlaneseq
        %v2870 = vshrl.u32 %v2869, 7
        %v2871 = vsub.s32 0, %v2870
        %v2872 = vrot.slane %v2867, %v2871
        %v2890 = vunpack.c.l.b16 %v2850
        %v2891 = vunpack.c.l.b16 %v2851
        %v2892 = vunpack.c.l.b16 %v2852
        %v2893 = vunpack.c.l.b16 %v2853
        %v2894 = vunpack.c.l.b16 %v2854
        %v2895 = vunpack.c.l.b16 %v2855
        %v2896 = vunpack.c.l.b16 %v2856
        %v2897 = vunpack.c.l.b16 %v2857
        %v2898 = vunpack.c.l.b16 %v2858
        %v2899 = vunpack.c.l.b16 %v2859
        %v2900 = vunpack.c.l.b16 %v2860
        %v2901 = vunpack.c.l.b16 %v2861
        %v2902 = vunpack.c.l.b16 %v2862
        %v2903 = vunpack.c.l.b16 %v2863
        %v2904 = vunpack.c.l.b16 %v2864
        %v2905 = vunpack.c.l.b16 %v2865
        %v2906 = vpack.c.b16 %v2891, %v2890
        %v2907 = vpack.c.b16 %v2893, %v2892
        %v2908 = vpack.c.b16 %v2895, %v2894
        %v2909 = vpack.c.b16 %v2897, %v2896
        %v2910 = vpack.c.b16 %v2899, %v2898
        %v2911 = vpack.c.b16 %v2901, %v2900
        %v2912 = vpack.c.b16 %v2903, %v2902
        %v2913 = vpack.c.b16 %v2905, %v2904
        %2922 = vmatprep.subr.bf16.mxu0 0
        %2923 = vmatpush1.bf16.msra.mxu0 %v2906
        %2924 = vmatprep.subr.bf16.mxu0 0
        %2925 = vmatpush1.bf16.msra.mxu0 %v2907
        %2926 = vmatprep.subr.bf16.mxu0 0
        %2927 = vmatpush1.bf16.msra.mxu0 %v2908
        %2928 = vmatprep.subr.bf16.mxu0 0
        %2929 = vmatpush1.bf16.msra.mxu0 %v2909
        %2930 = vmatprep.subr.bf16.mxu0 0
        %2931 = vmatpush1.bf16.msra.mxu0 %v2910
        %2932 = vmatprep.subr.bf16.mxu0 0
        %2933 = vmatpush1.bf16.msra.mxu0 %v2911
        %2934 = vmatprep.subr.bf16.mxu0 0
        %2935 = vmatpush1.bf16.msra.mxu0 %v2912
        %2936 = vmatprep.subr.bf16.mxu0 0
        %2937 = vmatpush1.bf16.msra.mxu0 %v2913
        %2938 = vmatprep.subr.bf16.mxu0 0
        %2939 = vmatpush1.bf16.msra.mxu0 0
        %2940 = vmatprep.subr.bf16.mxu0 0
        %2941 = vmatpush1.bf16.msra.mxu0 0
        %2942 = vmatprep.subr.bf16.mxu0 0
        %2943 = vmatpush1.bf16.msra.mxu0 0
        %2944 = vmatprep.subr.bf16.mxu0 0
        %2945 = vmatpush1.bf16.msra.mxu0 0
        %2946 = vmatprep.subr.bf16.mxu0 0
        %2947 = vmatpush1.bf16.msra.mxu0 0
        %2948 = vmatprep.subr.bf16.mxu0 0
        %2949 = vmatpush1.bf16.msra.mxu0 0
        %2950 = vmatprep.subr.bf16.mxu0 0
        %2951 = vmatpush1.bf16.msra.mxu0 0
        %2952 = vmatprep.subr.bf16.mxu0 0
        %2953 = vmatpush1.bf16.msra.mxu0 0
        %2954 = vmatprep.mubr.bf16.mxu0 0
        %2955 = vmatmul.mubr.bf16.gmra.mrb[0].mxu0 %v2866
        %v2956 = vpop.f32.mrb[0].mxu0
        %v2957 = vadd.f32 %v2872, %v2956
        %v2958 = vpop.f32.mrb[0].mxu0
        %v2959 = vpop.f32.mrb[0].mxu0
        %v2960 = vadd.f32 %v2872, %v2959
        %v2961 = vpop.f32.mrb[0].mxu0
        %2962 = vdwg.mxu0
        %2963 = vst [vmem:[%s239] sm:$0xff] %v2957
        %2964 = vst [vmem:[%s239 + $0x8] sm:$0xff] %v2960
        %p2965 = scmp.lt.s32.totalorder %s17, 1
        %s2966 = scalar_select %p2965, %s17, 1
        %s2967 = smul.addr %s2966, 2
        %s2968 = smul.addr %s2967, 8
        %s2969 = scalar_lea.vmem %s5, %s2968
        // Predicated region
        $region45: #{_lambda_.1} parent=39 // pred_check
          %p2970 = pneg %p145
        $region46: #{_lambda_.1} parent=39 // pred_check_branch
          %2972 = sbr.rel (%p2970) target = $region48
        $region47: #{_lambda_.1} parent=39 // pred_region
          _
        $region48: #{_lambda_.1} parent=39 // pred_fallthru
          _
      $region40: #{_lambda_.1} parent=5 // pred_fallthru
        _
      %p2973 = scmp.le.s32.totalorder 2, %s12
      // Predicated region
      $region49: #{_lambda_.1} parent=5 // pred_check
        %p2974 = pneg %p2973
      $region50: #{_lambda_.1} parent=5 // pred_check_branch
        %2976 = sbr.rel (%p2974) target = $region52
      $region51: #{_lambda_.1} parent=5 // pred_region
        %s2977 = ssub.s32 %s12, 2
        // Predicated region
        $region53: #{_lambda_.1} parent=51 // pred_check
          %p2978 = pneg %p151
        $region54: #{_lambda_.1} parent=51 // pred_check_branch
          %2980 = sbr.rel (%p2978) target = $region56
        $region55: #{_lambda_.1} parent=51 // pred_region
          %p2981 = scmp.lt.s32.totalorder %s18, 1
          %s2982 = scalar_select %p2981, %s18, 1
          %s2983 = smul.addr %s2982, 2
          %s2984 = smul.addr %s2983, 8
          %s2985 = scalar_lea.vmem %s5, %s2984
        $region56: #{_lambda_.1} parent=51 // pred_fallthru
          _
      $region52: #{_lambda_.1} parent=5 // pred_fallthru
        _
    $region6: #{_lambda_.1} parent=1 // loop_footer
      %s16 = sadd.s32 1, %s12
    $region7: #{_lambda_.1} parent=1 // loop_footer_branch
      %11 = sbr.rel target = $region3
    $region8: #{_lambda_.1} parent=1 // loop_exit
      _
    %2986 = vsyncpa [#allocation5], 1
    %s2987 = scalar_lea.sflag [#allocation5], 1
    %2988 = vsyncpa %s2987, 1

</llo_original>
